<compile_context>
chip_gen: v6e
topology: v6e:2x2x1
jax: 0.10.0
libtpu: 0.0.40
codegen_flags: <defaults>
</compile_context>

<pallas_src>
import functools

import jax
import jax.numpy as jnp
import numpy as np
from jax import lax
from jax.experimental import pallas as pl
from jax.experimental.pallas import tpu as pltpu

# Off-centre 3x3 taps, in the order shared by the kernel's window build and
# the wrapper's merged (8*Csq, Cout) weight.
_OFF_TAPS = tuple((ky, kx) for ky in range(3) for kx in range(3)
                  if not (ky == 1 and kx == 1))


# ----------------------------- Pallas kernel ------------------------------ #

def _fire_kernel(x_ref, wsq_ref, ssq_ref, wexp_ref, woff_ref, sout_ref,
                 oscale_ref, o_ref, xp_ref, *, version):
    """B0 pre-flattened NHWC images per grid step; squeeze + expand fused."""
    B0, HW, _ = x_ref.shape
    Hp2, Wp2, Csq = xp_ref.shape
    H, W = Hp2 - 2, Wp2 - 2
    cdt = wsq_ref.dtype                       # MXU operand dtype (f32 / bf16)

    # Re-zero the halo strips of the persistent padded scratch once per grid
    # step.  Megacore-safe: each TensorCore owns its own scratch and may never
    # execute program 0, so a program_id==0 init would be wrong.
    zrow = jnp.zeros((1, Wp2, Csq), xp_ref.dtype)
    zcol = jnp.zeros((Hp2, 1, Csq), xp_ref.dtype)
    xp_ref[0:1, :, :] = zrow
    xp_ref[H + 1:H + 2, :, :] = zrow
    xp_ref[:, 0:1, :] = zcol
    xp_ref[:, W + 1:W + 2, :] = zcol

    for b in range(B0):                       # static unroll; B0 is small
        x = x_ref[b]                          # (HW, Cin) -- no reshape needed

        # squeeze 1x1 conv: BN scale + conv bias already folded into wsq/ssq.
        z = jnp.dot(x.astype(cdt), wsq_ref[...],
                    preferred_element_type=jnp.float32)
        x1 = jnp.maximum(z + ssq_ref[...], 0.0)

        # Stage x1 into the interior of the padded scratch.  This is the one
        # (HW,C) <-> (H,W,C) relayout the 3x3 halo genuinely needs.
        xp_ref[1:H + 1, 1:W + 1, :] = x1.reshape(H, W, Csq).astype(xp_ref.dtype)

        # Main expand matmul: [w_e1 | w_e3(centre tap)] merged into one
        # lane-dense (Csq, Cout) weight.
        acc = jnp.dot(x1.astype(cdt), wexp_ref[...],
                      preferred_element_type=jnp.float32)

        # All 8 off-centre 3x3 taps as ONE im2col matmul with K = 8*Csq.
        # Weight columns are zero-padded to Cout, so it accumulates directly
        # into acc and the epilogue / store stay full-width.
        win = jnp.concatenate(
            [xp_ref[ky:ky + H, kx:kx + W, :] for (ky, kx) in _OFF_TAPS],
            axis=-1).reshape(HW, 8 * Csq)
        acc = acc + jnp.dot(win, woff_ref[...],
                            preferred_element_type=jnp.float32)

        y = acc + sout_ref[...]
        if version == 2:
            # Residual pushed through the folded bn_out scale:
            #   relu((y_pre + x) * s + t) = relu(y_pre*s + (b*s + t) + x*s)
            y = y + x.astype(jnp.float32) * oscale_ref[...]

        # Single full-width store per image (no channel-slab split).
        o_ref[b] = jnp.maximum(y, 0.0).astype(o_ref.dtype)


# ------------------------------- wrappers ---------------------------------- #

def _bn_fold(bn, eps=1e-5):
    """Inference BN -> per-channel (scale, shift)."""
    scale = bn["gamma"] / jnp.sqrt(bn["var"] + eps)
    shift = bn["beta"] - bn["mean"] * scale
    return scale, shift


def fire_forward_nhwc(x, params, *, version=1, compute_dtype=jnp.float32,
                      images_per_step=1):
    """Fire forward on an NHWC activation. x: (N, H, W, Cin), f32 or bf16."""
    N, H, W, Cin = x.shape
    HW = H * W
    Csq = params["w_sq"].shape[1]
    Ce1 = params["w_e1"].shape[1]
    Ce3 = params["w_e3"].shape[3]
    Cout = Ce1 + Ce3
    if version == 2 and Cin != Cout:
        raise ValueError("version=2 residual requires in_channels == "
                         "expand1x1_channels + expand3x3_channels")

    # Images per grid step (amortizes per-step overhead for small H*W).
    B0 = images_per_step if (0 < images_per_step <= N
                             and N % images_per_step == 0) else 1

    sq_s, sq_t = _bn_fold(params["bn_sq"])
    out_s, out_t = _bn_fold(params["bn_out"])

    # Fold BN scale + conv bias into the weights / one shift per channel.
    w_sq = (params["w_sq"] * sq_s[None, :]).astype(compute_dtype)
    s_sq = (params["b_sq"] * sq_s + sq_t).reshape(1, Csq).astype(jnp.float32)

    w_e1 = params["w_e1"] * out_s[None, :Ce1]
    w_e3 = params["w_e3"] * out_s[None, None, None, Ce1:]
    # expand1x1 merged with the centre tap of expand3x3 -> lane-dense Cout.
    w_exp = jnp.concatenate([w_e1, w_e3[1, 1]], axis=1).astype(compute_dtype)
    # 8 off-centre taps stacked along K -> (8*Csq, Ce3); zero-pad the e1
    # columns so the kernel accumulates straight into the full-width acc.
    w_off3 = jnp.concatenate([w_e3[ky, kx] for (ky, kx) in _OFF_TAPS], axis=0)
    w_off = jnp.concatenate(
        [jnp.zeros((8 * Csq, Ce1), w_off3.dtype), w_off3],
        axis=1).astype(compute_dtype)
    s_out = (jnp.concatenate([params["b_e1"], params["b_e3"]]) * out_s
             + out_t).reshape(1, Cout).astype(jnp.float32)
    o_scale = out_s.reshape(1, Cout).astype(jnp.float32)  # version=2 residual

    # Pre-flatten activations outside the kernel (free XLA metadata reshape).
    x_flat = x.reshape(N, HW, Cin)

    # Generation-aware scoped-VMEM budget from the per-step working set.
    xb = jnp.dtype(x.dtype).itemsize
    cb = jnp.dtype(compute_dtype).itemsize
    est = (2 * B0 * HW * (Cin + Cout) * xb            # x/out blocks (dbl-buf)
           + 2 * (Cin * Csq + 9 * Csq * Cout) * cb    # folded weights
           + (H + 2) * (W + 2) * Csq * cb             # padded scratch
           + HW * 8 * Csq * cb                        # im2col window
           + HW * (Csq + Cout) * 4)                   # x1 + acc (f32)
    try:
        cap = int(pltpu.get_tpu_info().vmem_capacity_bytes)
    except Exception:                                 # pragma: no cover
        cap = 64 * 2**20
    vmem_limit = int(min(max(2 * est, 32 * 2**20), int(0.85 * cap)))

    const = lambda shape: pl.BlockSpec(shape, lambda n: (0,) * len(shape))

    out = pl.pallas_call(
        functools.partial(_fire_kernel, version=version),
        out_shape=jax.ShapeDtypeStruct((N, HW, Cout), x.dtype),
        grid=(N // B0,),
        in_specs=[
            pl.BlockSpec((B0, HW, Cin), lambda n: (n, 0, 0)),  # x (flattened)
            const((Cin, Csq)),          # folded squeeze weight
            const((1, Csq)),            # folded squeeze shift
            const((Csq, Cout)),         # merged expand weight (e1 | e3 centre)
            const((8 * Csq, Cout)),     # merged off-centre e3 weight (im2col K)
            const((1, Cout)),           # folded output shift
            const((1, Cout)),           # bn_out scale (version=2 residual)
        ],
        out_specs=pl.BlockSpec((B0, HW, Cout), lambda n: (n, 0, 0)),
        scratch_shapes=[pltpu.VMEM((H + 2, W + 2, Csq), compute_dtype)],
        compiler_params=pltpu.CompilerParams(
            dimension_semantics=("parallel",),
            vmem_limit_bytes=vmem_limit),
    )(x_flat, w_sq, s_sq, w_exp, w_off, s_out, o_scale)
    return out.reshape(N, H, W, Cout)


def fire_forward(x_nchw, params, *, version=1, compute_dtype=jnp.float32,
                 images_per_step=1):
    """PyTorch-layout entry (NCHW in/out). Prefer fire_forward_nhwc and keep
    activations NHWC end-to-end to avoid per-module HBM transposes."""
    x = jnp.transpose(x_nchw, (0, 2, 3, 1))
    y = fire_forward_nhwc(x, params, version=version,
                          compute_dtype=compute_dtype,
                          images_per_step=images_per_step)
    return jnp.transpose(y, (0, 3, 1, 2))


# -------------------------- params & reference ----------------------------- #

def init_fire_params(key, in_c, sq_c, e1_c, e3_c):
    ks = jax.random.split(key, 8)
    n = lambda k, s, scale=0.1: scale * jax.random.normal(k, s, jnp.float32)

    def bn(k, c):
        k1, k2, k3, k4 = jax.random.split(k, 4)
        return dict(
            gamma=1.0 + 0.1 * jax.random.normal(k1, (c,), jnp.float32),
            beta=0.1 * jax.random.normal(k2, (c,), jnp.float32),
            mean=0.1 * jax.random.normal(k3, (c,), jnp.float32),
            var=0.5 + jnp.abs(jax.random.normal(k4, (c,), jnp.float32)),
        )

    return {
        # 1x1 conv weights stored (Cin, Cout); 3x3 stored (kh, kw, Cin, Cout)
        "w_sq": n(ks[0], (in_c, sq_c)),
        "b_sq": n(ks[1], (sq_c,)),
        "bn_sq": bn(ks[2], sq_c),
        "w_e1": n(ks[3], (sq_c, e1_c)),
        "b_e1": n(ks[4], (e1_c,)),
        "w_e3": n(ks[5], (3, 3, sq_c, e3_c)),
        "b_e3": n(ks[6], (e3_c,)),
        "bn_out": bn(ks[7], e1_c + e3_c),
    }


def fire_reference(x_nchw, params, *, version=1):
    """Plain-JAX reference (lax.conv), matches PyTorch eval-mode Fire."""
    x = jnp.transpose(x_nchw, (0, 2, 3, 1)).astype(jnp.float32)
    dn = ("NHWC", "HWIO", "NHWC")

    def conv(inp, w, b, pad):
        y = lax.conv_general_dilated(inp, w, (1, 1), pad, dimension_numbers=dn)
        return y + b.reshape(1, 1, 1, -1)

    sq_s, sq_t = _bn_fold(params["bn_sq"])
    out_s, out_t = _bn_fold(params["bn_out"])

    z = conv(x, params["w_sq"].reshape(1, 1, *params["w_sq"].shape),
             params["b_sq"], "VALID")
    x1 = jnp.maximum(z * sq_s + sq_t, 0.0)
    e1 = conv(x1, params["w_e1"].reshape(1, 1, *params["w_e1"].shape),
              params["b_e1"], "VALID")
    e3 = conv(x1, params["w_e3"], params["b_e3"], "SAME")
    y = jnp.concatenate([e1, e3], axis=-1)
    if version == 2:
        y = y + x
    y = jnp.maximum(y * out_s + out_t, 0.0)
    return jnp.transpose(y, (0, 3, 1, 2))


# --------------------------------- main ------------------------------------ #

if __name__ == "__main__":
    key = jax.random.PRNGKey(0)
    k1, k2, k3, k4, k5 = jax.random.split(key, 5)

    # 1) version=1 (module default), f32, two images per grid step.
    N, Cin, H, W = 2, 16, 8, 8
    sq_c, e1_c, e3_c = 8, 16, 16
    x = jax.random.normal(k1, (N, Cin, H, W), jnp.float32)
    params = init_fire_params(k2, Cin, sq_c, e1_c, e3_c)
    out = jax.block_until_ready(fire_forward(x, params, version=1,
                                             images_per_step=2))
    ref = jax.block_until_ready(fire_reference(x, params, version=1))
    np.testing.assert_allclose(np.asarray(out), np.asarray(ref),
                               rtol=5e-4, atol=1e-4)

    # 2) version=2 (residual; requires Cin == e1 + e3).
    Cin2 = e1_c + e3_c
    x2 = jax.random.normal(k3, (N, Cin2, H, W), jnp.float32)
    params2 = init_fire_params(k4, Cin2, sq_c, e1_c, e3_c)
    out2 = jax.block_until_ready(fire_forward(x2, params2, version=2))
    ref2 = jax.block_until_ready(fire_reference(x2, params2, version=2))
    np.testing.assert_allclose(np.asarray(out2), np.asarray(ref2),
                               rtol=5e-4, atol=1e-4)

    # 3) non-multiple-of-8 spatial size (exercises the relayout paths real
    #    SqueezeNet shapes hit: W = 55 / 27 / 13).
    x3 = jax.random.normal(k5, (1, Cin, 7, 7), jnp.float32)
    out3 = jax.block_until_ready(fire_forward(x3, params, version=1))
    ref3 = jax.block_until_ready(fire_reference(x3, params, version=1))
    np.testing.assert_allclose(np.asarray(out3), np.asarray(ref3),
                               rtol=5e-4, atol=1e-4)

    # 4) bf16 MXU operands + bf16 activation I/O (looser tolerance).
    xb = x.astype(jnp.bfloat16)
    outb = jax.block_until_ready(
        fire_forward(xb, params, version=1, compute_dtype=jnp.bfloat16,
                     images_per_step=2))
    np.testing.assert_allclose(np.asarray(outb.astype(jnp.float32)),
                               np.asarray(ref), rtol=5e-2, atol=5e-2)

    print("KERNEL_OK")
</pallas_src>

<mosaic_0001>
module attributes {stable_mosaic.version = 11 : i64} {
  func.func @_fire_kernel(%arg0: i32, %arg1: memref<2x64x16xf32, #tpu.memory_space<vmem>>, %arg2: memref<16x8xf32, #tpu.memory_space<vmem>>, %arg3: memref<1x8xf32, #tpu.memory_space<vmem>>, %arg4: memref<8x32xf32, #tpu.memory_space<vmem>>, %arg5: memref<64x32xf32, #tpu.memory_space<vmem>>, %arg6: memref<1x32xf32, #tpu.memory_space<vmem>>, %arg7: memref<1x32xf32, #tpu.memory_space<vmem>>, %arg8: memref<2x64x32xf32, #tpu.memory_space<vmem>>, %arg9: memref<10x10x8xf32, #tpu.memory_space<vmem>>) attributes {dimension_semantics = [#tpu.dimension_semantics<parallel>], iteration_bounds = array<i64: 1>, scalar_prefetch = 0 : i64, scratch_operands = 1 : i64, tpu.core_type = #tpu.core_type<tc>, window_params = [{transform_indices = @transform_0, window_bounds = array<i64: 2, 64, 16>}, {pipeline_mode = #tpu.pipeline_mode<synchronous>, transform_indices = @transform_1, window_bounds = array<i64: 16, 8>}, {pipeline_mode = #tpu.pipeline_mode<synchronous>, transform_indices = @transform_2, window_bounds = array<i64: 1, 8>}, {pipeline_mode = #tpu.pipeline_mode<synchronous>, transform_indices = @transform_3, window_bounds = array<i64: 8, 32>}, {pipeline_mode = #tpu.pipeline_mode<synchronous>, transform_indices = @transform_4, window_bounds = array<i64: 64, 32>}, {pipeline_mode = #tpu.pipeline_mode<synchronous>, transform_indices = @transform_5, window_bounds = array<i64: 1, 32>}, {pipeline_mode = #tpu.pipeline_mode<synchronous>, transform_indices = @transform_6, window_bounds = array<i64: 1, 32>}, {transform_indices = @transform_7, window_bounds = array<i64: 2, 64, 32>}]} {
    %cst = arith.constant 0.000000e+00 : f32
    %0 = vector.broadcast %cst : f32 to vector<1x10x8xf32>
    %cst_0 = arith.constant 0.000000e+00 : f32
    %1 = vector.broadcast %cst_0 : f32 to vector<10x1x8xf32>
    %c0 = arith.constant 0 : index
    %c0_1 = arith.constant 0 : index
    %c0_2 = arith.constant 0 : index
    %2 = vector.load %arg9[%c0, %c0_1, %c0_2] : memref<10x10x8xf32, #tpu.memory_space<vmem>>, vector<1x10x8xf32>
    tpu.vector_store %arg9[%c0, %c0_1, %c0_2], %0 {strides = array<i32>} : memref<10x10x8xf32, #tpu.memory_space<vmem>>, vector<1x10x8xf32>,
    %c9 = arith.constant 9 : index
    %c0_3 = arith.constant 0 : index
    %c0_4 = arith.constant 0 : index
    %3 = vector.load %arg9[%c9, %c0_3, %c0_4] : memref<10x10x8xf32, #tpu.memory_space<vmem>>, vector<1x10x8xf32>
    tpu.vector_store %arg9[%c9, %c0_3, %c0_4], %0 {strides = array<i32>} : memref<10x10x8xf32, #tpu.memory_space<vmem>>, vector<1x10x8xf32>,
    %c0_5 = arith.constant 0 : index
    %c0_6 = arith.constant 0 : index
    %c0_7 = arith.constant 0 : index
    %4 = vector.load %arg9[%c0_5, %c0_6, %c0_7] : memref<10x10x8xf32, #tpu.memory_space<vmem>>, vector<10x1x8xf32>
    tpu.vector_store %arg9[%c0_5, %c0_6, %c0_7], %1 {strides = array<i32>} : memref<10x10x8xf32, #tpu.memory_space<vmem>>, vector<10x1x8xf32>,
    %c0_8 = arith.constant 0 : index
    %c9_9 = arith.constant 9 : index
    %c0_10 = arith.constant 0 : index
    %5 = vector.load %arg9[%c0_8, %c9_9, %c0_10] : memref<10x10x8xf32, #tpu.memory_space<vmem>>, vector<10x1x8xf32>
    tpu.vector_store %arg9[%c0_8, %c9_9, %c0_10], %1 {strides = array<i32>} : memref<10x10x8xf32, #tpu.memory_space<vmem>>, vector<10x1x8xf32>,
    %c0_11 = arith.constant 0 : index
    %c0_12 = arith.constant 0 : index
    %c0_13 = arith.constant 0 : index
    %6 = vector.load %arg1[%c0_11, %c0_12, %c0_13] : memref<2x64x16xf32, #tpu.memory_space<vmem>>, vector<1x64x16xf32>
    %7 = vector.shape_cast %6 : vector<1x64x16xf32> to vector<64x16xf32>
    %c0_14 = arith.constant 0 : index
    %c0_15 = arith.constant 0 : index
    %8 = vector.load %arg2[%c0_14, %c0_15] : memref<16x8xf32, #tpu.memory_space<vmem>>, vector<16x8xf32>
    %cst_16 = arith.constant dense<0.000000e+00> : vector<64x8xf32>
    %9 = tpu.matmul %7, %8, %cst_16 {dimension_numbers = #tpu.dot_dimension_numbers<[1], [0], [0], [1], [0, 0, 1, 1], [], []>} : vector<64x16xf32>, vector<16x8xf32>, vector<64x8xf32> -> vector<64x8xf32>
    %c0_17 = arith.constant 0 : index
    %c0_18 = arith.constant 0 : index
    %10 = vector.load %arg3[%c0_17, %c0_18] : memref<1x8xf32, #tpu.memory_space<vmem>>, vector<1x8xf32>
    %11 = vector.broadcast %10 : vector<1x8xf32> to vector<64x8xf32>
    %12 = arith.addf %9, %11 : vector<64x8xf32>
    %cst_19 = arith.constant 0.000000e+00 : f32
    %13 = vector.broadcast %cst_19 : f32 to vector<64x8xf32>
    %14 = arith.maximumf %12, %13 : vector<64x8xf32>
    %15 = vector.shape_cast %14 : vector<64x8xf32> to vector<8x8x8xf32>
    %c1 = arith.constant 1 : index
    %c1_20 = arith.constant 1 : index
    %c0_21 = arith.constant 0 : index
    %16 = vector.load %arg9[%c1, %c1_20, %c0_21] : memref<10x10x8xf32, #tpu.memory_space<vmem>>, vector<8x8x8xf32>
    tpu.vector_store %arg9[%c1, %c1_20, %c0_21], %15 {strides = array<i32>} : memref<10x10x8xf32, #tpu.memory_space<vmem>>, vector<8x8x8xf32>,
    %c0_22 = arith.constant 0 : index
    %c0_23 = arith.constant 0 : index
    %17 = vector.load %arg4[%c0_22, %c0_23] : memref<8x32xf32, #tpu.memory_space<vmem>>, vector<8x32xf32>
    %cst_24 = arith.constant dense<0.000000e+00> : vector<64x32xf32>
    %18 = tpu.matmul %14, %17, %cst_24 {dimension_numbers = #tpu.dot_dimension_numbers<[1], [0], [0], [1], [0, 0, 1, 1], [], []>} : vector<64x8xf32>, vector<8x32xf32>, vector<64x32xf32> -> vector<64x32xf32>
    %c0_25 = arith.constant 0 : index
    %c0_26 = arith.constant 0 : index
    %c0_27 = arith.constant 0 : index
    %19 = vector.load %arg9[%c0_25, %c0_26, %c0_27] : memref<10x10x8xf32, #tpu.memory_space<vmem>>, vector<8x8x8xf32>
    %c0_28 = arith.constant 0 : index
    %c1_29 = arith.constant 1 : index
    %c0_30 = arith.constant 0 : index
    %20 = vector.load %arg9[%c0_28, %c1_29, %c0_30] : memref<10x10x8xf32, #tpu.memory_space<vmem>>, vector<8x8x8xf32>
    %c0_31 = arith.constant 0 : index
    %c2 = arith.constant 2 : index
    %c0_32 = arith.constant 0 : index
    %21 = vector.load %arg9[%c0_31, %c2, %c0_32] : memref<10x10x8xf32, #tpu.memory_space<vmem>>, vector<8x8x8xf32>
    %c1_33 = arith.constant 1 : index
    %c0_34 = arith.constant 0 : index
    %c0_35 = arith.constant 0 : index
    %22 = vector.load %arg9[%c1_33, %c0_34, %c0_35] : memref<10x10x8xf32, #tpu.memory_space<vmem>>, vector<8x8x8xf32>
    %c1_36 = arith.constant 1 : index
    %c2_37 = arith.constant 2 : index
    %c0_38 = arith.constant 0 : index
    %23 = vector.load %arg9[%c1_36, %c2_37, %c0_38] : memref<10x10x8xf32, #tpu.memory_space<vmem>>, vector<8x8x8xf32>
    %c2_39 = arith.constant 2 : index
    %c0_40 = arith.constant 0 : index
    %c0_41 = arith.constant 0 : index
    %24 = vector.load %arg9[%c2_39, %c0_40, %c0_41] : memref<10x10x8xf32, #tpu.memory_space<vmem>>, vector<8x8x8xf32>
    %c2_42 = arith.constant 2 : index
    %c1_43 = arith.constant 1 : index
    %c0_44 = arith.constant 0 : index
    %25 = vector.load %arg9[%c2_42, %c1_43, %c0_44] : memref<10x10x8xf32, #tpu.memory_space<vmem>>, vector<8x8x8xf32>
    %c2_45 = arith.constant 2 : index
    %c2_46 = arith.constant 2 : index
    %c0_47 = arith.constant 0 : index
    %26 = vector.load %arg9[%c2_45, %c2_46, %c0_47] : memref<10x10x8xf32, #tpu.memory_space<vmem>>, vector<8x8x8xf32>
    %27 = tpu.concatenate %19, %20, %21, %22, %23, %24, %25, %26 in 2 : vector<8x8x8xf32>, vector<8x8x8xf32>, vector<8x8x8xf32>, vector<8x8x8xf32>, vector<8x8x8xf32>, vector<8x8x8xf32>, vector<8x8x8xf32>, vector<8x8x8xf32> -> vector<8x8x64xf32>
    %28 = vector.shape_cast %27 : vector<8x8x64xf32> to vector<64x64xf32>
    %c0_48 = arith.constant 0 : index
    %c0_49 = arith.constant 0 : index
    %29 = vector.load %arg5[%c0_48, %c0_49] : memref<64x32xf32, #tpu.memory_space<vmem>>, vector<64x32xf32>
    %cst_50 = arith.constant dense<0.000000e+00> : vector<64x32xf32>
    %30 = tpu.matmul %28, %29, %cst_50 {dimension_numbers = #tpu.dot_dimension_numbers<[1], [0], [0], [1], [0, 0, 1, 1], [], []>} : vector<64x64xf32>, vector<64x32xf32>, vector<64x32xf32> -> vector<64x32xf32>
    %31 = arith.addf %18, %30 : vector<64x32xf32>
    %c0_51 = arith.constant 0 : index
    %c0_52 = arith.constant 0 : index
    %32 = vector.load %arg6[%c0_51, %c0_52] : memref<1x32xf32, #tpu.memory_space<vmem>>, vector<1x32xf32>
    %33 = vector.broadcast %32 : vector<1x32xf32> to vector<64x32xf32>
    %34 = arith.addf %31, %33 : vector<64x32xf32>
    %cst_53 = arith.constant 0.000000e+00 : f32
    %35 = vector.broadcast %cst_53 : f32 to vector<64x32xf32>
    %36 = arith.maximumf %34, %35 : vector<64x32xf32>
    %c0_54 = arith.constant 0 : index
    %c0_55 = arith.constant 0 : index
    %c0_56 = arith.constant 0 : index
    %37 = vector.load %arg8[%c0_54, %c0_55, %c0_56] : memref<2x64x32xf32, #tpu.memory_space<vmem>>, vector<1x64x32xf32>
    %38 = vector.shape_cast %37 : vector<1x64x32xf32> to vector<64x32xf32>
    %39 = vector.shape_cast %36 : vector<64x32xf32> to vector<1x64x32xf32>
    tpu.vector_store %arg8[%c0_54, %c0_55, %c0_56], %39 {strides = array<i32>} : memref<2x64x32xf32, #tpu.memory_space<vmem>>, vector<1x64x32xf32>,
    %c1_57 = arith.constant 1 : index
    %c0_58 = arith.constant 0 : index
    %c0_59 = arith.constant 0 : index
    %40 = vector.load %arg1[%c1_57, %c0_58, %c0_59] : memref<2x64x16xf32, #tpu.memory_space<vmem>>, vector<1x64x16xf32>
    %41 = vector.shape_cast %40 : vector<1x64x16xf32> to vector<64x16xf32>
    %c0_60 = arith.constant 0 : index
    %c0_61 = arith.constant 0 : index
    %42 = vector.load %arg2[%c0_60, %c0_61] : memref<16x8xf32, #tpu.memory_space<vmem>>, vector<16x8xf32>
    %cst_62 = arith.constant dense<0.000000e+00> : vector<64x8xf32>
    %43 = tpu.matmul %41, %42, %cst_62 {dimension_numbers = #tpu.dot_dimension_numbers<[1], [0], [0], [1], [0, 0, 1, 1], [], []>} : vector<64x16xf32>, vector<16x8xf32>, vector<64x8xf32> -> vector<64x8xf32>
    %c0_63 = arith.constant 0 : index
    %c0_64 = arith.constant 0 : index
    %44 = vector.load %arg3[%c0_63, %c0_64] : memref<1x8xf32, #tpu.memory_space<vmem>>, vector<1x8xf32>
    %45 = vector.broadcast %44 : vector<1x8xf32> to vector<64x8xf32>
    %46 = arith.addf %43, %45 : vector<64x8xf32>
    %cst_65 = arith.constant 0.000000e+00 : f32
    %47 = vector.broadcast %cst_65 : f32 to vector<64x8xf32>
    %48 = arith.maximumf %46, %47 : vector<64x8xf32>
    %49 = vector.shape_cast %48 : vector<64x8xf32> to vector<8x8x8xf32>
    %c1_66 = arith.constant 1 : index
    %c1_67 = arith.constant 1 : index
    %c0_68 = arith.constant 0 : index
    %50 = vector.load %arg9[%c1_66, %c1_67, %c0_68] : memref<10x10x8xf32, #tpu.memory_space<vmem>>, vector<8x8x8xf32>
    tpu.vector_store %arg9[%c1_66, %c1_67, %c0_68], %49 {strides = array<i32>} : memref<10x10x8xf32, #tpu.memory_space<vmem>>, vector<8x8x8xf32>,
    %c0_69 = arith.constant 0 : index
    %c0_70 = arith.constant 0 : index
    %51 = vector.load %arg4[%c0_69, %c0_70] : memref<8x32xf32, #tpu.memory_space<vmem>>, vector<8x32xf32>
    %cst_71 = arith.constant dense<0.000000e+00> : vector<64x32xf32>
    %52 = tpu.matmul %48, %51, %cst_71 {dimension_numbers = #tpu.dot_dimension_numbers<[1], [0], [0], [1], [0, 0, 1, 1], [], []>} : vector<64x8xf32>, vector<8x32xf32>, vector<64x32xf32> -> vector<64x32xf32>
    %c0_72 = arith.constant 0 : index
    %c0_73 = arith.constant 0 : index
    %c0_74 = arith.constant 0 : index
    %53 = vector.load %arg9[%c0_72, %c0_73, %c0_74] : memref<10x10x8xf32, #tpu.memory_space<vmem>>, vector<8x8x8xf32>
    %c0_75 = arith.constant 0 : index
    %c1_76 = arith.constant 1 : index
    %c0_77 = arith.constant 0 : index
    %54 = vector.load %arg9[%c0_75, %c1_76, %c0_77] : memref<10x10x8xf32, #tpu.memory_space<vmem>>, vector<8x8x8xf32>
    %c0_78 = arith.constant 0 : index
    %c2_79 = arith.constant 2 : index
    %c0_80 = arith.constant 0 : index
    %55 = vector.load %arg9[%c0_78, %c2_79, %c0_80] : memref<10x10x8xf32, #tpu.memory_space<vmem>>, vector<8x8x8xf32>
    %c1_81 = arith.constant 1 : index
    %c0_82 = arith.constant 0 : index
    %c0_83 = arith.constant 0 : index
    %56 = vector.load %arg9[%c1_81, %c0_82, %c0_83] : memref<10x10x8xf32, #tpu.memory_space<vmem>>, vector<8x8x8xf32>
    %c1_84 = arith.constant 1 : index
    %c2_85 = arith.constant 2 : index
    %c0_86 = arith.constant 0 : index
    %57 = vector.load %arg9[%c1_84, %c2_85, %c0_86] : memref<10x10x8xf32, #tpu.memory_space<vmem>>, vector<8x8x8xf32>
    %c2_87 = arith.constant 2 : index
    %c0_88 = arith.constant 0 : index
    %c0_89 = arith.constant 0 : index
    %58 = vector.load %arg9[%c2_87, %c0_88, %c0_89] : memref<10x10x8xf32, #tpu.memory_space<vmem>>, vector<8x8x8xf32>
    %c2_90 = arith.constant 2 : index
    %c1_91 = arith.constant 1 : index
    %c0_92 = arith.constant 0 : index
    %59 = vector.load %arg9[%c2_90, %c1_91, %c0_92] : memref<10x10x8xf32, #tpu.memory_space<vmem>>, vector<8x8x8xf32>
    %c2_93 = arith.constant 2 : index
    %c2_94 = arith.constant 2 : index
    %c0_95 = arith.constant 0 : index
    %60 = vector.load %arg9[%c2_93, %c2_94, %c0_95] : memref<10x10x8xf32, #tpu.memory_space<vmem>>, vector<8x8x8xf32>
    %61 = tpu.concatenate %53, %54, %55, %56, %57, %58, %59, %60 in 2 : vector<8x8x8xf32>, vector<8x8x8xf32>, vector<8x8x8xf32>, vector<8x8x8xf32>, vector<8x8x8xf32>, vector<8x8x8xf32>, vector<8x8x8xf32>, vector<8x8x8xf32> -> vector<8x8x64xf32>
    %62 = vector.shape_cast %61 : vector<8x8x64xf32> to vector<64x64xf32>
    %c0_96 = arith.constant 0 : index
    %c0_97 = arith.constant 0 : index
    %63 = vector.load %arg5[%c0_96, %c0_97] : memref<64x32xf32, #tpu.memory_space<vmem>>, vector<64x32xf32>
    %cst_98 = arith.constant dense<0.000000e+00> : vector<64x32xf32>
    %64 = tpu.matmul %62, %63, %cst_98 {dimension_numbers = #tpu.dot_dimension_numbers<[1], [0], [0], [1], [0, 0, 1, 1], [], []>} : vector<64x64xf32>, vector<64x32xf32>, vector<64x32xf32> -> vector<64x32xf32>
    %65 = arith.addf %52, %64 : vector<64x32xf32>
    %c0_99 = arith.constant 0 : index
    %c0_100 = arith.constant 0 : index
    %66 = vector.load %arg6[%c0_99, %c0_100] : memref<1x32xf32, #tpu.memory_space<vmem>>, vector<1x32xf32>
    %67 = vector.broadcast %66 : vector<1x32xf32> to vector<64x32xf32>
    %68 = arith.addf %65, %67 : vector<64x32xf32>
    %cst_101 = arith.constant 0.000000e+00 : f32
    %69 = vector.broadcast %cst_101 : f32 to vector<64x32xf32>
    %70 = arith.maximumf %68, %69 : vector<64x32xf32>
    %c1_102 = arith.constant 1 : index
    %c0_103 = arith.constant 0 : index
    %c0_104 = arith.constant 0 : index
    %71 = vector.load %arg8[%c1_102, %c0_103, %c0_104] : memref<2x64x32xf32, #tpu.memory_space<vmem>>, vector<1x64x32xf32>
    %72 = vector.shape_cast %71 : vector<1x64x32xf32> to vector<64x32xf32>
    %73 = vector.shape_cast %70 : vector<64x32xf32> to vector<1x64x32xf32>
    tpu.vector_store %arg8[%c1_102, %c0_103, %c0_104], %73 {strides = array<i32>} : memref<2x64x32xf32, #tpu.memory_space<vmem>>, vector<1x64x32xf32>,
    return
  }
  func.func @transform_0(%arg0: i32) -> (i32, i32, i32) {
    %c0_i32 = arith.constant 0 : i32
    %c0_i32_0 = arith.constant 0 : i32
    %c0_i32_1 = arith.constant 0 : i32
    return %arg0, %c0_i32, %c0_i32_0 : i32, i32, i32
  }
  func.func @transform_1(%arg0: i32) -> (i32, i32) {
    %c0_i32 = arith.constant 0 : i32
    %c0_i32_0 = arith.constant 0 : i32
    %c0_i32_1 = arith.constant 0 : i32
    return %c0_i32, %c0_i32_0 : i32, i32
  }
  func.func @transform_2(%arg0: i32) -> (i32, i32) {
    %c0_i32 = arith.constant 0 : i32
    %c0_i32_0 = arith.constant 0 : i32
    %c0_i32_1 = arith.constant 0 : i32
    return %c0_i32, %c0_i32_0 : i32, i32
  }
  func.func @transform_3(%arg0: i32) -> (i32, i32) {
    %c0_i32 = arith.constant 0 : i32
    %c0_i32_0 = arith.constant 0 : i32
    %c0_i32_1 = arith.constant 0 : i32
    return %c0_i32, %c0_i32_0 : i32, i32
  }
  func.func @transform_4(%arg0: i32) -> (i32, i32) {
    %c0_i32 = arith.constant 0 : i32
    %c0_i32_0 = arith.constant 0 : i32
    %c0_i32_1 = arith.constant 0 : i32
    return %c0_i32, %c0_i32_0 : i32, i32
  }
  func.func @transform_5(%arg0: i32) -> (i32, i32) {
    %c0_i32 = arith.constant 0 : i32
    %c0_i32_0 = arith.constant 0 : i32
    %c0_i32_1 = arith.constant 0 : i32
    return %c0_i32, %c0_i32_0 : i32, i32
  }
  func.func @transform_6(%arg0: i32) -> (i32, i32) {
    %c0_i32 = arith.constant 0 : i32
    %c0_i32_0 = arith.constant 0 : i32
    %c0_i32_1 = arith.constant 0 : i32
    return %c0_i32, %c0_i32_0 : i32, i32
  }
  func.func @transform_7(%arg0: i32) -> (i32, i32, i32) {
    %c0_i32 = arith.constant 0 : i32
    %c0_i32_0 = arith.constant 0 : i32
    %c0_i32_1 = arith.constant 0 : i32
    return %arg0, %c0_i32, %c0_i32_0 : i32, i32, i32
  }
}

</mosaic_0001>

<llo_original>
// kernel: tpu_custom_call.1
$region0: #{tpu_custom_call.1}
  #allocation0 [shape = 'u32[]', space=smem, size = 0x4, offset = 0x4, fixed_abs, tag = 'smem constant byte address 0x4 - core index']
  #allocation1 [shape = 'u32[144,128]{1,0:T(1,128)}', space=vmem, size = 0x12000, scoped, tag = 'internal scratch']
  #allocation2 [shape = 'f32[10,10,8]{2,1,0:T(8,128)}', space=vmem, size = 0x14000, scoped, tag = 'scratch operand']
  %s0 = inlined_call_operand.vmem [shape: f32[2,64,16], index: 0, kind: input, shape index: {}]
  %s1 = inlined_call_operand.vmem [shape: f32[16,8], index: 1, kind: input, shape index: {}]
  %s2 = inlined_call_operand.vmem [shape: f32[1,8], index: 2, kind: input, shape index: {}]
  %s3 = inlined_call_operand.vmem [shape: f32[8,32], index: 3, kind: input, shape index: {}]
  %s4 = inlined_call_operand.vmem [shape: f32[64,32], index: 4, kind: input, shape index: {}]
  %s5 = inlined_call_operand.vmem [shape: f32[1,32], index: 5, kind: input, shape index: {}]
  %s6 = inlined_call_operand.vmem [shape: f32[1,32], index: 6, kind: input, shape index: {}]
  %s7 = inlined_call_operand.vmem [shape: f32[2,64,32], index: 7, kind: output, shape index: {}]
  %s8 = sld [smem:[#allocation0]]
  $region38: #{tpu_custom_call.1} parent=0
    _
  %s10 = ssub.s32 1, %s8
  %s11 = scalar_select 0, %s10, %s8
  // Predicated region
  $region2: #{tpu_custom_call.1} parent=0 // pred_check
    _
  $region3: #{tpu_custom_call.1} parent=0 // pred_check_branch
    %13 = sbr.rel (0) target = $region5
  $region4: #{tpu_custom_call.1} parent=0 // pred_region
    _
  $region5: #{tpu_custom_call.1} parent=0 // pred_fallthru
    _
  // Predicated region
  $region6: #{tpu_custom_call.1} parent=0 // pred_check
    _
  $region7: #{tpu_custom_call.1} parent=0 // pred_check_branch
    %15 = sbr.rel (0) target = $region9
  $region8: #{tpu_custom_call.1} parent=0 // pred_region
    _
  $region9: #{tpu_custom_call.1} parent=0 // pred_fallthru
    _
  // Predicated region
  $region10: #{tpu_custom_call.1} parent=0 // pred_check
    _
  $region11: #{tpu_custom_call.1} parent=0 // pred_check_branch
    %17 = sbr.rel (0) target = $region13
  $region12: #{tpu_custom_call.1} parent=0 // pred_region
    _
  $region13: #{tpu_custom_call.1} parent=0 // pred_fallthru
    _
  // Predicated region
  $region14: #{tpu_custom_call.1} parent=0 // pred_check
    _
  $region15: #{tpu_custom_call.1} parent=0 // pred_check_branch
    %19 = sbr.rel (0) target = $region17
  $region16: #{tpu_custom_call.1} parent=0 // pred_region
    _
  $region17: #{tpu_custom_call.1} parent=0 // pred_fallthru
    _
  // Predicated region
  $region18: #{tpu_custom_call.1} parent=0 // pred_check
    _
  $region19: #{tpu_custom_call.1} parent=0 // pred_check_branch
    %21 = sbr.rel (0) target = $region21
  $region20: #{tpu_custom_call.1} parent=0 // pred_region
    _
  $region21: #{tpu_custom_call.1} parent=0 // pred_fallthru
    _
  // Predicated region
  $region22: #{tpu_custom_call.1} parent=0 // pred_check
    _
  $region23: #{tpu_custom_call.1} parent=0 // pred_check_branch
    %23 = sbr.rel (0) target = $region25
  $region24: #{tpu_custom_call.1} parent=0 // pred_region
    _
  $region25: #{tpu_custom_call.1} parent=0 // pred_fallthru
    _
  // Predicated region
  $region26: #{tpu_custom_call.1} parent=0 // pred_check
    _
  $region27: #{tpu_custom_call.1} parent=0 // pred_check_branch
    %25 = sbr.rel (0) target = $region29
  $region28: #{tpu_custom_call.1} parent=0 // pred_region
    _
  $region29: #{tpu_custom_call.1} parent=0 // pred_fallthru
    _
  %vm26 = vcmask 64512
  %27 = vst.msk [vmem:[#allocation2] sm:$0xff] %vm26, 0.0
  %vm28 = vcmask 58368
  %29 = vst.msk [vmem:[#allocation2 + $0x8] sm:$0x3] %vm28, 0.0
  %s30 = scalar_lea.vmem [#allocation2], 144
  %31 = vst.msk [vmem:[%s30] sm:$0xff] %vm26, 0.0
  %32 = vst.msk [vmem:[%s30 + $0x8] sm:$0x3] %vm28, 0.0
  %vm33 = vcmask 57344
  %34 = vst.msk [vmem:[#allocation2] sm:$0x1] %vm33, 0.0
  %35 = vst.msk [vmem:[#allocation2 + $0x10] sm:$0x1] %vm33, 0.0
  %36 = vst.msk [vmem:[#allocation2 + $0x20] sm:$0x1] %vm33, 0.0
  %37 = vst.msk [vmem:[#allocation2 + $0x30] sm:$0x1] %vm33, 0.0
  %38 = vst.msk [vmem:[#allocation2 + $0x40] sm:$0x1] %vm33, 0.0
  %39 = vst.msk [vmem:[#allocation2 + $0x50] sm:$0x1] %vm33, 0.0
  %40 = vst.msk [vmem:[#allocation2 + $0x60] sm:$0x1] %vm33, 0.0
  %41 = vst.msk [vmem:[#allocation2 + $0x70] sm:$0x1] %vm33, 0.0
  %42 = vst.msk [vmem:[#allocation2 + $0x80] sm:$0x1] %vm33, 0.0
  %43 = vst.msk [vmem:[#allocation2 + $0x90] sm:$0x1] %vm33, 0.0
  %44 = vst.msk [vmem:[#allocation2 + $0x9] sm:$0x1] %vm33, 0.0
  %45 = vst.msk [vmem:[#allocation2 + $0x19] sm:$0x1] %vm33, 0.0
  %46 = vst.msk [vmem:[#allocation2 + $0x29] sm:$0x1] %vm33, 0.0
  %47 = vst.msk [vmem:[#allocation2 + $0x39] sm:$0x1] %vm33, 0.0
  %48 = vst.msk [vmem:[#allocation2 + $0x49] sm:$0x1] %vm33, 0.0
  %49 = vst.msk [vmem:[#allocation2 + $0x59] sm:$0x1] %vm33, 0.0
  %50 = vst.msk [vmem:[#allocation2 + $0x69] sm:$0x1] %vm33, 0.0
  %51 = vst.msk [vmem:[#allocation2 + $0x79] sm:$0x1] %vm33, 0.0
  %52 = vst.msk [vmem:[#allocation2 + $0x89] sm:$0x1] %vm33, 0.0
  %53 = vst.msk [vmem:[#allocation2 + $0x99] sm:$0x1] %vm33, 0.0
  %v54 = vld [vmem:[%s0] sm:$0xff]
  %v55 = vld [vmem:[%s0 + $0x8] sm:$0xff]
  %v56 = vld [vmem:[%s0 + $0x10] sm:$0xff]
  %v57 = vld [vmem:[%s0 + $0x18] sm:$0xff]
  %v58 = vld [vmem:[%s0 + $0x20] sm:$0xff]
  %v59 = vld [vmem:[%s0 + $0x28] sm:$0xff]
  %v60 = vld [vmem:[%s0 + $0x30] sm:$0xff]
  %v61 = vld [vmem:[%s0 + $0x38] sm:$0xff]
  %v62 = vld [vmem:[%s1] sm:$0xff]
  %v63 = vld [vmem:[%s1 + $0x8] sm:$0xff]
  %v64 = vld [vmem:[%s2] sm:$0x1]
  %v66 = vlaneseq
  %v67 = vshrl.u32 %v66, 7
  %v68 = vsub.s32 0, %v67
  %v69 = vrot.slane %v64, %v68
  %vm71 = vcmask 130048
  %v73 = vsel %vm71, %v54, 0
  %v76 = vsel %vm71, %v55, 0
  %v79 = vsel %vm71, %v56, 0
  %v82 = vsel %vm71, %v57, 0
  %v85 = vsel %vm71, %v58, 0
  %v88 = vsel %vm71, %v59, 0
  %v91 = vsel %vm71, %v60, 0
  %v94 = vsel %vm71, %v61, 0
  %96 = vmatprep.subr.mxu0 0.0
  %97 = vmatpush1.msra.mxu0 0.0
  %98 = vmatprep.subr.mxu0 0.0
  %99 = vmatpush1.msra.mxu0 0.0
  %100 = vmatprep.subr.mxu0 0.0
  %101 = vmatpush1.msra.mxu0 0.0
  %102 = vmatprep.subr.mxu0 0.0
  %103 = vmatpush1.msra.mxu0 0.0
  %104 = vmatprep.subr.mxu0 0.0
  %105 = vmatpush1.msra.mxu0 0.0
  %106 = vmatprep.subr.mxu0 0.0
  %107 = vmatpush1.msra.mxu0 0.0
  %108 = vmatprep.subr.mxu0 0.0
  %109 = vmatpush1.msra.mxu0 0.0
  %110 = vmatprep.subr.mxu0 0.0
  %111 = vmatpush1.msra.mxu0 0.0
  %112 = vmatprep.subr.mxu0 0.0
  %113 = vmatpush1.msra.mxu0 0.0
  %114 = vmatprep.subr.mxu0 0.0
  %115 = vmatpush1.msra.mxu0 0.0
  %116 = vmatprep.subr.mxu0 0.0
  %117 = vmatpush1.msra.mxu0 0.0
  %118 = vmatprep.subr.mxu0 0.0
  %119 = vmatpush1.msra.mxu0 0.0
  %120 = vmatprep.subr.mxu0 0.0
  %121 = vmatpush1.msra.mxu0 0.0
  %122 = vmatprep.subr.mxu0 0.0
  %123 = vmatpush1.msra.mxu0 0.0
  %124 = vmatprep.subr.mxu0 0.0
  %125 = vmatpush1.msra.mxu0 %v63
  %126 = vmatprep.subr.mxu0 0.0
  %127 = vmatpush1.msra.mxu0 %v62
  %128 = vmatprep.subr.mxu0 0.0
  %129 = vmatpush2.msra.mxu0 0.0
  %130 = vmatprep.subr.mxu0 0.0
  %131 = vmatpush2.msra.mxu0 0.0
  %132 = vmatprep.subr.mxu0 0.0
  %133 = vmatpush2.msra.mxu0 0.0
  %134 = vmatprep.subr.mxu0 0.0
  %135 = vmatpush2.msra.mxu0 0.0
  %136 = vmatprep.subr.mxu0 0.0
  %137 = vmatpush2.msra.mxu0 0.0
  %138 = vmatprep.subr.mxu0 0.0
  %139 = vmatpush2.msra.mxu0 0.0
  %140 = vmatprep.subr.mxu0 0.0
  %141 = vmatpush2.msra.mxu0 0.0
  %142 = vmatprep.subr.mxu0 0.0
  %143 = vmatpush2.msra.mxu0 0.0
  %144 = vmatprep.subr.mxu0 0.0
  %145 = vmatpush2.msra.mxu0 0.0
  %146 = vmatprep.subr.mxu0 0.0
  %147 = vmatpush2.msra.mxu0 0.0
  %148 = vmatprep.subr.mxu0 0.0
  %149 = vmatpush2.msra.mxu0 0.0
  %150 = vmatprep.subr.mxu0 0.0
  %151 = vmatpush2.msra.mxu0 0.0
  %152 = vmatprep.subr.mxu0 0.0
  %153 = vmatpush2.msra.mxu0 0.0
  %154 = vmatprep.subr.mxu0 0.0
  %155 = vmatpush2.msra.mxu0 0.0
  %156 = vmatprep.subr.mxu0 0.0
  %157 = vmatpush2.msra.mxu0 0.0
  %158 = vmatprep.subr.mxu0 0.0
  %159 = vmatpush2.msra.mxu0 0.0
  %160 = vmatprep.mubr.f32.mxu0 0.0
  %161 = vmatmul.mubr.f32.gmra.mxu0 %v73
  %v162 = vpop.f32.mrf.mxu0
  %v163 = vadd.f32 %v69, %v162
  %v164 = vpop.f32.mrf.mxu0
  %165 = vmatprep.mubr.f32.mxu0 0.0
  %166 = vmatmul.mubr.f32.gmra.mxu0 %v76
  %v167 = vpop.f32.mrf.mxu0
  %v168 = vadd.f32 %v69, %v167
  %v169 = vpop.f32.mrf.mxu0
  %170 = vmatprep.mubr.f32.mxu0 0.0
  %171 = vmatmul.mubr.f32.gmra.mxu0 %v79
  %v172 = vpop.f32.mrf.mxu0
  %v173 = vadd.f32 %v69, %v172
  %v174 = vpop.f32.mrf.mxu0
  %175 = vmatprep.mubr.f32.mxu0 0.0
  %176 = vmatmul.mubr.f32.gmra.mxu0 %v82
  %v177 = vpop.f32.mrf.mxu0
  %v178 = vadd.f32 %v69, %v177
  %v179 = vpop.f32.mrf.mxu0
  %180 = vmatprep.mubr.f32.mxu0 0.0
  %181 = vmatmul.mubr.f32.gmra.mxu0 %v85
  %v182 = vpop.f32.mrf.mxu0
  %v183 = vadd.f32 %v69, %v182
  %v184 = vpop.f32.mrf.mxu0
  %185 = vmatprep.mubr.f32.mxu0 0.0
  %186 = vmatmul.mubr.f32.gmra.mxu0 %v88
  %v187 = vpop.f32.mrf.mxu0
  %v188 = vadd.f32 %v69, %v187
  %v189 = vpop.f32.mrf.mxu0
  %190 = vmatprep.mubr.f32.mxu0 0.0
  %191 = vmatmul.mubr.f32.gmra.mxu0 %v91
  %v192 = vpop.f32.mrf.mxu0
  %v193 = vadd.f32 %v69, %v192
  %v194 = vpop.f32.mrf.mxu0
  %195 = vmatprep.mubr.f32.mxu0 0.0
  %196 = vmatmul.mubr.f32.gmra.mxu0 %v94
  %v197 = vpop.f32.mrf.mxu0
  %v198 = vadd.f32 %v69, %v197
  %v199 = vpop.f32.mrf.mxu0
  %200 = vdwg.mxu0
  %v201 = vmax.f32 %v163, 0.0
  %v202 = vmax.f32 %v168, 0.0
  %v203 = vmax.f32 %v173, 0.0
  %v204 = vmax.f32 %v178, 0.0
  %v205 = vmax.f32 %v183, 0.0
  %v206 = vmax.f32 %v188, 0.0
  %v207 = vmax.f32 %v193, 0.0
  %v208 = vmax.f32 %v198, 0.0
  %s209 = scalar_lea.vmem [#allocation2], 16
  %210 = vst.msk [vmem:[%s209 + $0x1] sm:$0xff] %vm26, %v201
  %211 = vst.msk [vmem:[%s209 + $0x11] sm:$0xff] %vm26, %v202
  %212 = vst.msk [vmem:[%s209 + $0x21] sm:$0xff] %vm26, %v203
  %213 = vst.msk [vmem:[%s209 + $0x31] sm:$0xff] %vm26, %v204
  %214 = vst.msk [vmem:[%s209 + $0x41] sm:$0xff] %vm26, %v205
  %215 = vst.msk [vmem:[%s209 + $0x51] sm:$0xff] %vm26, %v206
  %216 = vst.msk [vmem:[%s209 + $0x61] sm:$0xff] %vm26, %v207
  %217 = vst.msk [vmem:[%s209 + $0x71] sm:$0xff] %vm26, %v208
  %v218 = vld [vmem:[%s3] sm:$0xff]
  %v219 = vld [vmem:[#allocation2] sm:$0xff]
  %v220 = vld [vmem:[#allocation2 + $0x10] sm:$0xff]
  %v221 = vld [vmem:[#allocation2 + $0x20] sm:$0xff]
  %v222 = vld [vmem:[#allocation2 + $0x30] sm:$0xff]
  %v223 = vld [vmem:[#allocation2 + $0x40] sm:$0xff]
  %v224 = vld [vmem:[#allocation2 + $0x50] sm:$0xff]
  %v225 = vld [vmem:[#allocation2 + $0x60] sm:$0xff]
  %v226 = vld [vmem:[#allocation2 + $0x70] sm:$0xff]
  %v227 = vld [vmem:[#allocation2 + $0x1] sm:$0xff]
  %v228 = vld [vmem:[#allocation2 + $0x11] sm:$0xff]
  %v229 = vld [vmem:[#allocation2 + $0x21] sm:$0xff]
  %v230 = vld [vmem:[#allocation2 + $0x31] sm:$0xff]
  %v231 = vld [vmem:[#allocation2 + $0x41] sm:$0xff]
  %v232 = vld [vmem:[#allocation2 + $0x51] sm:$0xff]
  %v233 = vld [vmem:[#allocation2 + $0x61] sm:$0xff]
  %v234 = vld [vmem:[#allocation2 + $0x71] sm:$0xff]
  %v235 = vld [vmem:[#allocation2 + $0x2] sm:$0xff]
  %v236 = vld [vmem:[#allocation2 + $0x12] sm:$0xff]
  %v237 = vld [vmem:[#allocation2 + $0x22] sm:$0xff]
  %v238 = vld [vmem:[#allocation2 + $0x32] sm:$0xff]
  %v239 = vld [vmem:[#allocation2 + $0x42] sm:$0xff]
  %v240 = vld [vmem:[#allocation2 + $0x52] sm:$0xff]
  %v241 = vld [vmem:[#allocation2 + $0x62] sm:$0xff]
  %v242 = vld [vmem:[#allocation2 + $0x72] sm:$0xff]
  %v243 = vld [vmem:[%s209] sm:$0xff]
  %v244 = vld [vmem:[%s209 + $0x10] sm:$0xff]
  %v245 = vld [vmem:[%s209 + $0x20] sm:$0xff]
  %v246 = vld [vmem:[%s209 + $0x30] sm:$0xff]
  %v247 = vld [vmem:[%s209 + $0x40] sm:$0xff]
  %v248 = vld [vmem:[%s209 + $0x50] sm:$0xff]
  %v249 = vld [vmem:[%s209 + $0x60] sm:$0xff]
  %v250 = vld [vmem:[%s209 + $0x70] sm:$0xff]
  %v251 = vld [vmem:[%s209 + $0x2] sm:$0xff]
  %v252 = vld [vmem:[%s209 + $0x12] sm:$0xff]
  %v253 = vld [vmem:[%s209 + $0x22] sm:$0xff]
  %v254 = vld [vmem:[%s209 + $0x32] sm:$0xff]
  %v255 = vld [vmem:[%s209 + $0x42] sm:$0xff]
  %v256 = vld [vmem:[%s209 + $0x52] sm:$0xff]
  %v257 = vld [vmem:[%s209 + $0x62] sm:$0xff]
  %v258 = vld [vmem:[%s209 + $0x72] sm:$0xff]
  %s259 = scalar_lea.vmem [#allocation2], 32
  %v260 = vld [vmem:[%s259] sm:$0xff]
  %v261 = vld [vmem:[%s259 + $0x10] sm:$0xff]
  %v262 = vld [vmem:[%s259 + $0x20] sm:$0xff]
  %v263 = vld [vmem:[%s259 + $0x30] sm:$0xff]
  %v264 = vld [vmem:[%s259 + $0x40] sm:$0xff]
  %v265 = vld [vmem:[%s259 + $0x50] sm:$0xff]
  %v266 = vld [vmem:[%s259 + $0x60] sm:$0xff]
  %v267 = vld [vmem:[%s259 + $0x70] sm:$0xff]
  %v268 = vld [vmem:[%s259 + $0x1] sm:$0xff]
  %v269 = vld [vmem:[%s259 + $0x11] sm:$0xff]
  %v270 = vld [vmem:[%s259 + $0x21] sm:$0xff]
  %v271 = vld [vmem:[%s259 + $0x31] sm:$0xff]
  %v272 = vld [vmem:[%s259 + $0x41] sm:$0xff]
  %v273 = vld [vmem:[%s259 + $0x51] sm:$0xff]
  %v274 = vld [vmem:[%s259 + $0x61] sm:$0xff]
  %v275 = vld [vmem:[%s259 + $0x71] sm:$0xff]
  %v276 = vld [vmem:[%s259 + $0x2] sm:$0xff]
  %v277 = vld [vmem:[%s259 + $0x12] sm:$0xff]
  %v278 = vld [vmem:[%s259 + $0x22] sm:$0xff]
  %v279 = vld [vmem:[%s259 + $0x32] sm:$0xff]
  %v280 = vld [vmem:[%s259 + $0x42] sm:$0xff]
  %v281 = vld [vmem:[%s259 + $0x52] sm:$0xff]
  %v282 = vld [vmem:[%s259 + $0x62] sm:$0xff]
  %v283 = vld [vmem:[%s259 + $0x72] sm:$0xff]
  %292 = vrot.lane.b32.xlu0 %v227, 8
  %v293 = vpop.permute.xlu0 %292
  %294 = vrot.lane.b32.xlu0 %v228, 8
  %v295 = vpop.permute.xlu0 %294
  %296 = vrot.lane.b32.xlu0 %v229, 8
  %v297 = vpop.permute.xlu0 %296
  %298 = vrot.lane.b32.xlu0 %v230, 8
  %v299 = vpop.permute.xlu0 %298
  %300 = vrot.lane.b32.xlu0 %v231, 8
  %v301 = vpop.permute.xlu0 %300
  %302 = vrot.lane.b32.xlu0 %v232, 8
  %v303 = vpop.permute.xlu0 %302
  %304 = vrot.lane.b32.xlu0 %v233, 8
  %v305 = vpop.permute.xlu0 %304
  %306 = vrot.lane.b32.xlu0 %v234, 8
  %v307 = vpop.permute.xlu0 %306
  %324 = vrot.lane.b32.xlu0 %v235, 16
  %v325 = vpop.permute.xlu0 %324
  %326 = vrot.lane.b32.xlu0 %v236, 16
  %v327 = vpop.permute.xlu0 %326
  %328 = vrot.lane.b32.xlu0 %v237, 16
  %v329 = vpop.permute.xlu0 %328
  %330 = vrot.lane.b32.xlu0 %v238, 16
  %v331 = vpop.permute.xlu0 %330
  %332 = vrot.lane.b32.xlu0 %v239, 16
  %v333 = vpop.permute.xlu0 %332
  %334 = vrot.lane.b32.xlu0 %v240, 16
  %v335 = vpop.permute.xlu0 %334
  %336 = vrot.lane.b32.xlu0 %v241, 16
  %v337 = vpop.permute.xlu0 %336
  %338 = vrot.lane.b32.xlu0 %v242, 16
  %v339 = vpop.permute.xlu0 %338
  %356 = vrot.lane.b32.xlu0 %v243, 24
  %v357 = vpop.permute.xlu0 %356
  %358 = vrot.lane.b32.xlu0 %v244, 24
  %v359 = vpop.permute.xlu0 %358
  %360 = vrot.lane.b32.xlu0 %v245, 24
  %v361 = vpop.permute.xlu0 %360
  %362 = vrot.lane.b32.xlu0 %v246, 24
  %v363 = vpop.permute.xlu0 %362
  %364 = vrot.lane.b32.xlu0 %v247, 24
  %v365 = vpop.permute.xlu0 %364
  %366 = vrot.lane.b32.xlu0 %v248, 24
  %v367 = vpop.permute.xlu0 %366
  %368 = vrot.lane.b32.xlu0 %v249, 24
  %v369 = vpop.permute.xlu0 %368
  %370 = vrot.lane.b32.xlu0 %v250, 24
  %v371 = vpop.permute.xlu0 %370
  %388 = vrot.lane.b32.xlu0 %v251, 32
  %v389 = vpop.permute.xlu0 %388
  %390 = vrot.lane.b32.xlu0 %v252, 32
  %v391 = vpop.permute.xlu0 %390
  %392 = vrot.lane.b32.xlu0 %v253, 32
  %v393 = vpop.permute.xlu0 %392
  %394 = vrot.lane.b32.xlu0 %v254, 32
  %v395 = vpop.permute.xlu0 %394
  %396 = vrot.lane.b32.xlu0 %v255, 32
  %v397 = vpop.permute.xlu0 %396
  %398 = vrot.lane.b32.xlu0 %v256, 32
  %v399 = vpop.permute.xlu0 %398
  %400 = vrot.lane.b32.xlu0 %v257, 32
  %v401 = vpop.permute.xlu0 %400
  %402 = vrot.lane.b32.xlu0 %v258, 32
  %v403 = vpop.permute.xlu0 %402
  %420 = vrot.lane.b32.xlu0 %v260, 40
  %v421 = vpop.permute.xlu0 %420
  %422 = vrot.lane.b32.xlu0 %v261, 40
  %v423 = vpop.permute.xlu0 %422
  %424 = vrot.lane.b32.xlu0 %v262, 40
  %v425 = vpop.permute.xlu0 %424
  %426 = vrot.lane.b32.xlu0 %v263, 40
  %v427 = vpop.permute.xlu0 %426
  %428 = vrot.lane.b32.xlu0 %v264, 40
  %v429 = vpop.permute.xlu0 %428
  %430 = vrot.lane.b32.xlu0 %v265, 40
  %v431 = vpop.permute.xlu0 %430
  %432 = vrot.lane.b32.xlu0 %v266, 40
  %v433 = vpop.permute.xlu0 %432
  %434 = vrot.lane.b32.xlu0 %v267, 40
  %v435 = vpop.permute.xlu0 %434
  %452 = vrot.lane.b32.xlu0 %v268, 48
  %v453 = vpop.permute.xlu0 %452
  %454 = vrot.lane.b32.xlu0 %v269, 48
  %v455 = vpop.permute.xlu0 %454
  %456 = vrot.lane.b32.xlu0 %v270, 48
  %v457 = vpop.permute.xlu0 %456
  %458 = vrot.lane.b32.xlu0 %v271, 48
  %v459 = vpop.permute.xlu0 %458
  %460 = vrot.lane.b32.xlu0 %v272, 48
  %v461 = vpop.permute.xlu0 %460
  %462 = vrot.lane.b32.xlu0 %v273, 48
  %v463 = vpop.permute.xlu0 %462
  %464 = vrot.lane.b32.xlu0 %v274, 48
  %v465 = vpop.permute.xlu0 %464
  %466 = vrot.lane.b32.xlu0 %v275, 48
  %v467 = vpop.permute.xlu0 %466
  %484 = vrot.lane.b32.xlu0 %v276, 56
  %v485 = vpop.permute.xlu0 %484
  %486 = vrot.lane.b32.xlu0 %v277, 56
  %v487 = vpop.permute.xlu0 %486
  %488 = vrot.lane.b32.xlu0 %v278, 56
  %v489 = vpop.permute.xlu0 %488
  %490 = vrot.lane.b32.xlu0 %v279, 56
  %v491 = vpop.permute.xlu0 %490
  %492 = vrot.lane.b32.xlu0 %v280, 56
  %v493 = vpop.permute.xlu0 %492
  %494 = vrot.lane.b32.xlu0 %v281, 56
  %v495 = vpop.permute.xlu0 %494
  %496 = vrot.lane.b32.xlu0 %v282, 56
  %v497 = vpop.permute.xlu0 %496
  %498 = vrot.lane.b32.xlu0 %v283, 56
  %v499 = vpop.permute.xlu0 %498
  %v508 = vsel %vm26, %v219, %v293
  %v509 = vsel %vm26, %v220, %v295
  %v510 = vsel %vm26, %v221, %v297
  %v511 = vsel %vm26, %v222, %v299
  %v512 = vsel %vm26, %v223, %v301
  %v513 = vsel %vm26, %v224, %v303
  %v514 = vsel %vm26, %v225, %v305
  %v515 = vsel %vm26, %v226, %v307
  %v516 = vsel %vm71, %v508, %v325
  %v517 = vsel %vm71, %v509, %v327
  %v518 = vsel %vm71, %v510, %v329
  %v519 = vsel %vm71, %v511, %v331
  %v520 = vsel %vm71, %v512, %v333
  %v521 = vsel %vm71, %v513, %v335
  %v522 = vsel %vm71, %v514, %v337
  %v523 = vsel %vm71, %v515, %v339
  %vm524 = vcmask 195584
  %v525 = vsel %vm524, %v516, %v357
  %v526 = vsel %vm524, %v517, %v359
  %v527 = vsel %vm524, %v518, %v361
  %v528 = vsel %vm524, %v519, %v363
  %v529 = vsel %vm524, %v520, %v365
  %v530 = vsel %vm524, %v521, %v367
  %v531 = vsel %vm524, %v522, %v369
  %v532 = vsel %vm524, %v523, %v371
  %vm533 = vcmask 261120
  %v534 = vsel %vm533, %v525, %v389
  %v535 = vsel %vm533, %v526, %v391
  %v536 = vsel %vm533, %v527, %v393
  %v537 = vsel %vm533, %v528, %v395
  %v538 = vsel %vm533, %v529, %v397
  %v539 = vsel %vm533, %v530, %v399
  %v540 = vsel %vm533, %v531, %v401
  %v541 = vsel %vm533, %v532, %v403
  %vm542 = vcmask 326656
  %v543 = vsel %vm542, %v534, %v421
  %v544 = vsel %vm542, %v535, %v423
  %v545 = vsel %vm542, %v536, %v425
  %v546 = vsel %vm542, %v537, %v427
  %v547 = vsel %vm542, %v538, %v429
  %v548 = vsel %vm542, %v539, %v431
  %v549 = vsel %vm542, %v540, %v433
  %v550 = vsel %vm542, %v541, %v435
  %vm551 = vcmask 392192
  %v552 = vsel %vm551, %v543, %v453
  %v553 = vsel %vm551, %v544, %v455
  %v554 = vsel %vm551, %v545, %v457
  %v555 = vsel %vm551, %v546, %v459
  %v556 = vsel %vm551, %v547, %v461
  %v557 = vsel %vm551, %v548, %v463
  %v558 = vsel %vm551, %v549, %v465
  %v559 = vsel %vm551, %v550, %v467
  %vm560 = vcmask 457728
  %v561 = vsel %vm560, %v552, %v485
  %v562 = vsel %vm560, %v553, %v487
  %v563 = vsel %vm560, %v554, %v489
  %v564 = vsel %vm560, %v555, %v491
  %v565 = vsel %vm560, %v556, %v493
  %v566 = vsel %vm560, %v557, %v495
  %v567 = vsel %vm560, %v558, %v497
  %v568 = vsel %vm560, %v559, %v499
  %v569 = vld [vmem:[%s4] sm:$0xff]
  %v570 = vld [vmem:[%s4 + $0x8] sm:$0xff]
  %v571 = vld [vmem:[%s4 + $0x10] sm:$0xff]
  %v572 = vld [vmem:[%s4 + $0x18] sm:$0xff]
  %v573 = vld [vmem:[%s4 + $0x20] sm:$0xff]
  %v574 = vld [vmem:[%s4 + $0x28] sm:$0xff]
  %v575 = vld [vmem:[%s4 + $0x30] sm:$0xff]
  %v576 = vld [vmem:[%s4 + $0x38] sm:$0xff]
  %vm577 = vcmask 523264
  %v579 = vsel %vm577, %v561, 0
  %v582 = vsel %vm577, %v562, 0
  %v585 = vsel %vm577, %v563, 0
  %v588 = vsel %vm577, %v564, 0
  %v591 = vsel %vm577, %v565, 0
  %v594 = vsel %vm577, %v566, 0
  %v597 = vsel %vm577, %v567, 0
  %v600 = vsel %vm577, %v568, 0
  %602 = vmatprep.subr.mxu0 0.0
  %603 = vmatpush1.msra.mxu0 0.0
  %604 = vmatprep.subr.mxu0 0.0
  %605 = vmatpush1.msra.mxu0 0.0
  %606 = vmatprep.subr.mxu0 0.0
  %607 = vmatpush1.msra.mxu0 0.0
  %608 = vmatprep.subr.mxu0 0.0
  %609 = vmatpush1.msra.mxu0 0.0
  %610 = vmatprep.subr.mxu0 0.0
  %611 = vmatpush1.msra.mxu0 0.0
  %612 = vmatprep.subr.mxu0 0.0
  %613 = vmatpush1.msra.mxu0 0.0
  %614 = vmatprep.subr.mxu0 0.0
  %615 = vmatpush1.msra.mxu0 0.0
  %616 = vmatprep.subr.mxu0 0.0
  %617 = vmatpush1.msra.mxu0 0.0
  %618 = vmatprep.subr.mxu0 0.0
  %619 = vmatpush1.msra.mxu0 %v576
  %620 = vmatprep.subr.mxu0 0.0
  %621 = vmatpush1.msra.mxu0 %v575
  %622 = vmatprep.subr.mxu0 0.0
  %623 = vmatpush1.msra.mxu0 %v574
  %624 = vmatprep.subr.mxu0 0.0
  %625 = vmatpush1.msra.mxu0 %v573
  %626 = vmatprep.subr.mxu0 0.0
  %627 = vmatpush1.msra.mxu0 %v572
  %628 = vmatprep.subr.mxu0 0.0
  %629 = vmatpush1.msra.mxu0 %v571
  %630 = vmatprep.subr.mxu0 0.0
  %631 = vmatpush1.msra.mxu0 %v570
  %632 = vmatprep.subr.mxu0 0.0
  %633 = vmatpush1.msra.mxu0 %v569
  %634 = vmatprep.subr.mxu0 0.0
  %635 = vmatpush2.msra.mxu0 0.0
  %636 = vmatprep.subr.mxu0 0.0
  %637 = vmatpush2.msra.mxu0 0.0
  %638 = vmatprep.subr.mxu0 0.0
  %639 = vmatpush2.msra.mxu0 0.0
  %640 = vmatprep.subr.mxu0 0.0
  %641 = vmatpush2.msra.mxu0 0.0
  %642 = vmatprep.subr.mxu0 0.0
  %643 = vmatpush2.msra.mxu0 0.0
  %644 = vmatprep.subr.mxu0 0.0
  %645 = vmatpush2.msra.mxu0 0.0
  %646 = vmatprep.subr.mxu0 0.0
  %647 = vmatpush2.msra.mxu0 0.0
  %648 = vmatprep.subr.mxu0 0.0
  %649 = vmatpush2.msra.mxu0 0.0
  %650 = vmatprep.subr.mxu0 0.0
  %651 = vmatpush2.msra.mxu0 0.0
  %652 = vmatprep.subr.mxu0 0.0
  %653 = vmatpush2.msra.mxu0 0.0
  %654 = vmatprep.subr.mxu0 0.0
  %655 = vmatpush2.msra.mxu0 0.0
  %656 = vmatprep.subr.mxu0 0.0
  %657 = vmatpush2.msra.mxu0 0.0
  %658 = vmatprep.subr.mxu0 0.0
  %659 = vmatpush2.msra.mxu0 0.0
  %660 = vmatprep.subr.mxu0 0.0
  %661 = vmatpush2.msra.mxu0 0.0
  %662 = vmatprep.subr.mxu0 0.0
  %663 = vmatpush2.msra.mxu0 0.0
  %664 = vmatprep.subr.mxu0 0.0
  %665 = vmatpush2.msra.mxu0 0.0
  %666 = vmatprep.mubr.f32.mxu0 0.0
  %667 = vmatmul.mubr.f32.gmra.mxu0 %v579
  %v668 = vpop.f32.mrf.mxu0
  %v669 = vadd.f32 0.0, %v668
  %v670 = vpop.f32.mrf.mxu0
  %671 = vmatprep.mubr.f32.mxu0 0.0
  %672 = vmatmul.mubr.f32.gmra.mxu0 %v582
  %v673 = vpop.f32.mrf.mxu0
  %v674 = vadd.f32 0.0, %v673
  %v675 = vpop.f32.mrf.mxu0
  %676 = vmatprep.mubr.f32.mxu0 0.0
  %677 = vmatmul.mubr.f32.gmra.mxu0 %v585
  %v678 = vpop.f32.mrf.mxu0
  %v679 = vadd.f32 0.0, %v678
  %v680 = vpop.f32.mrf.mxu0
  %681 = vmatprep.mubr.f32.mxu0 0.0
  %682 = vmatmul.mubr.f32.gmra.mxu0 %v588
  %v683 = vpop.f32.mrf.mxu0
  %v684 = vadd.f32 0.0, %v683
  %v685 = vpop.f32.mrf.mxu0
  %686 = vmatprep.mubr.f32.mxu0 0.0
  %687 = vmatmul.mubr.f32.gmra.mxu0 %v591
  %v688 = vpop.f32.mrf.mxu0
  %v689 = vadd.f32 0.0, %v688
  %v690 = vpop.f32.mrf.mxu0
  %691 = vmatprep.mubr.f32.mxu0 0.0
  %692 = vmatmul.mubr.f32.gmra.mxu0 %v594
  %v693 = vpop.f32.mrf.mxu0
  %v694 = vadd.f32 0.0, %v693
  %v695 = vpop.f32.mrf.mxu0
  %696 = vmatprep.mubr.f32.mxu0 0.0
  %697 = vmatmul.mubr.f32.gmra.mxu0 %v597
  %v698 = vpop.f32.mrf.mxu0
  %v699 = vadd.f32 0.0, %v698
  %v700 = vpop.f32.mrf.mxu0
  %701 = vmatprep.mubr.f32.mxu0 0.0
  %702 = vmatmul.mubr.f32.gmra.mxu0 %v600
  %v703 = vpop.f32.mrf.mxu0
  %v704 = vadd.f32 0.0, %v703
  %v705 = vpop.f32.mrf.mxu0
  %706 = vdwg.mxu0
  %v708 = vsel %vm26, %v201, 0
  %v711 = vsel %vm26, %v202, 0
  %v714 = vsel %vm26, %v203, 0
  %v717 = vsel %vm26, %v204, 0
  %v720 = vsel %vm26, %v205, 0
  %v723 = vsel %vm26, %v206, 0
  %v726 = vsel %vm26, %v207, 0
  %v729 = vsel %vm26, %v208, 0
  %731 = vmatprep.subr.mxu0 0.0
  %732 = vmatpush1.msra.mxu0 0.0
  %733 = vmatprep.subr.mxu0 0.0
  %734 = vmatpush1.msra.mxu0 0.0
  %735 = vmatprep.subr.mxu0 0.0
  %736 = vmatpush1.msra.mxu0 0.0
  %737 = vmatprep.subr.mxu0 0.0
  %738 = vmatpush1.msra.mxu0 0.0
  %739 = vmatprep.subr.mxu0 0.0
  %740 = vmatpush1.msra.mxu0 0.0
  %741 = vmatprep.subr.mxu0 0.0
  %742 = vmatpush1.msra.mxu0 0.0
  %743 = vmatprep.subr.mxu0 0.0
  %744 = vmatpush1.msra.mxu0 0.0
  %745 = vmatprep.subr.mxu0 0.0
  %746 = vmatpush1.msra.mxu0 0.0
  %747 = vmatprep.subr.mxu0 0.0
  %748 = vmatpush1.msra.mxu0 0.0
  %749 = vmatprep.subr.mxu0 0.0
  %750 = vmatpush1.msra.mxu0 0.0
  %751 = vmatprep.subr.mxu0 0.0
  %752 = vmatpush1.msra.mxu0 0.0
  %753 = vmatprep.subr.mxu0 0.0
  %754 = vmatpush1.msra.mxu0 0.0
  %755 = vmatprep.subr.mxu0 0.0
  %756 = vmatpush1.msra.mxu0 0.0
  %757 = vmatprep.subr.mxu0 0.0
  %758 = vmatpush1.msra.mxu0 0.0
  %759 = vmatprep.subr.mxu0 0.0
  %760 = vmatpush1.msra.mxu0 0.0
  %761 = vmatprep.subr.mxu0 0.0
  %762 = vmatpush1.msra.mxu0 %v218
  %763 = vmatprep.subr.mxu0 0.0
  %764 = vmatpush2.msra.mxu0 0.0
  %765 = vmatprep.subr.mxu0 0.0
  %766 = vmatpush2.msra.mxu0 0.0
  %767 = vmatprep.subr.mxu0 0.0
  %768 = vmatpush2.msra.mxu0 0.0
  %769 = vmatprep.subr.mxu0 0.0
  %770 = vmatpush2.msra.mxu0 0.0
  %771 = vmatprep.subr.mxu0 0.0
  %772 = vmatpush2.msra.mxu0 0.0
  %773 = vmatprep.subr.mxu0 0.0
  %774 = vmatpush2.msra.mxu0 0.0
  %775 = vmatprep.subr.mxu0 0.0
  %776 = vmatpush2.msra.mxu0 0.0
  %777 = vmatprep.subr.mxu0 0.0
  %778 = vmatpush2.msra.mxu0 0.0
  %779 = vmatprep.subr.mxu0 0.0
  %780 = vmatpush2.msra.mxu0 0.0
  %781 = vmatprep.subr.mxu0 0.0
  %782 = vmatpush2.msra.mxu0 0.0
  %783 = vmatprep.subr.mxu0 0.0
  %784 = vmatpush2.msra.mxu0 0.0
  %785 = vmatprep.subr.mxu0 0.0
  %786 = vmatpush2.msra.mxu0 0.0
  %787 = vmatprep.subr.mxu0 0.0
  %788 = vmatpush2.msra.mxu0 0.0
  %789 = vmatprep.subr.mxu0 0.0
  %790 = vmatpush2.msra.mxu0 0.0
  %791 = vmatprep.subr.mxu0 0.0
  %792 = vmatpush2.msra.mxu0 0.0
  %793 = vmatprep.subr.mxu0 0.0
  %794 = vmatpush2.msra.mxu0 0.0
  %795 = vmatprep.mubr.f32.mxu0 0.0
  %796 = vmatmul.mubr.f32.gmra.mxu0 %v708
  %v797 = vpop.f32.mrf.mxu0
  %v798 = vadd.f32 %v669, %v797
  %v799 = vpop.f32.mrf.mxu0
  %800 = vmatprep.mubr.f32.mxu0 0.0
  %801 = vmatmul.mubr.f32.gmra.mxu0 %v711
  %v802 = vpop.f32.mrf.mxu0
  %v803 = vadd.f32 %v674, %v802
  %v804 = vpop.f32.mrf.mxu0
  %805 = vmatprep.mubr.f32.mxu0 0.0
  %806 = vmatmul.mubr.f32.gmra.mxu0 %v714
  %v807 = vpop.f32.mrf.mxu0
  %v808 = vadd.f32 %v679, %v807
  %v809 = vpop.f32.mrf.mxu0
  %810 = vmatprep.mubr.f32.mxu0 0.0
  %811 = vmatmul.mubr.f32.gmra.mxu0 %v717
  %v812 = vpop.f32.mrf.mxu0
  %v813 = vadd.f32 %v684, %v812
  %v814 = vpop.f32.mrf.mxu0
  %815 = vmatprep.mubr.f32.mxu0 0.0
  %816 = vmatmul.mubr.f32.gmra.mxu0 %v720
  %v817 = vpop.f32.mrf.mxu0
  %v818 = vadd.f32 %v689, %v817
  %v819 = vpop.f32.mrf.mxu0
  %820 = vmatprep.mubr.f32.mxu0 0.0
  %821 = vmatmul.mubr.f32.gmra.mxu0 %v723
  %v822 = vpop.f32.mrf.mxu0
  %v823 = vadd.f32 %v694, %v822
  %v824 = vpop.f32.mrf.mxu0
  %825 = vmatprep.mubr.f32.mxu0 0.0
  %826 = vmatmul.mubr.f32.gmra.mxu0 %v726
  %v827 = vpop.f32.mrf.mxu0
  %v828 = vadd.f32 %v699, %v827
  %v829 = vpop.f32.mrf.mxu0
  %830 = vmatprep.mubr.f32.mxu0 0.0
  %831 = vmatmul.mubr.f32.gmra.mxu0 %v729
  %v832 = vpop.f32.mrf.mxu0
  %v833 = vadd.f32 %v704, %v832
  %v834 = vpop.f32.mrf.mxu0
  %835 = vdwg.mxu0
  %v836 = vld [vmem:[%s5] sm:$0x1]
  %v838 = vlaneseq
  %v839 = vshrl.u32 %v838, 7
  %v840 = vsub.s32 0, %v839
  %v841 = vrot.slane %v836, %v840
  %v843 = vadd.f32 %v798, %v841
  %v844 = vadd.f32 %v803, %v841
  %v845 = vadd.f32 %v808, %v841
  %v846 = vadd.f32 %v813, %v841
  %v847 = vadd.f32 %v818, %v841
  %v848 = vadd.f32 %v823, %v841
  %v849 = vadd.f32 %v828, %v841
  %v850 = vadd.f32 %v833, %v841
  %v851 = vmax.f32 %v843, 0.0
  %v852 = vmax.f32 %v844, 0.0
  %v853 = vmax.f32 %v845, 0.0
  %v854 = vmax.f32 %v846, 0.0
  %v855 = vmax.f32 %v847, 0.0
  %v856 = vmax.f32 %v848, 0.0
  %v857 = vmax.f32 %v849, 0.0
  %v858 = vmax.f32 %v850, 0.0
  %859 = vst.msk [vmem:[%s7] sm:$0xff] %vm533, %v851
  %860 = vst.msk [vmem:[%s7 + $0x8] sm:$0xff] %vm533, %v852
  %861 = vst.msk [vmem:[%s7 + $0x10] sm:$0xff] %vm533, %v853
  %862 = vst.msk [vmem:[%s7 + $0x18] sm:$0xff] %vm533, %v854
  %863 = vst.msk [vmem:[%s7 + $0x20] sm:$0xff] %vm533, %v855
  %864 = vst.msk [vmem:[%s7 + $0x28] sm:$0xff] %vm533, %v856
  %865 = vst.msk [vmem:[%s7 + $0x30] sm:$0xff] %vm533, %v857
  %866 = vst.msk [vmem:[%s7 + $0x38] sm:$0xff] %vm533, %v858
  %s867 = scalar_lea.vmem %s0, 64
  %v868 = vld [vmem:[%s867] sm:$0xff]
  %v869 = vld [vmem:[%s867 + $0x8] sm:$0xff]
  %v870 = vld [vmem:[%s867 + $0x10] sm:$0xff]
  %v871 = vld [vmem:[%s867 + $0x18] sm:$0xff]
  %v872 = vld [vmem:[%s867 + $0x20] sm:$0xff]
  %v873 = vld [vmem:[%s867 + $0x28] sm:$0xff]
  %v874 = vld [vmem:[%s867 + $0x30] sm:$0xff]
  %v875 = vld [vmem:[%s867 + $0x38] sm:$0xff]
  %v876 = vld [vmem:[%s1] sm:$0xff]
  %v877 = vld [vmem:[%s1 + $0x8] sm:$0xff]
  %v878 = vld [vmem:[%s2] sm:$0x1]
  %v880 = vlaneseq
  %v881 = vshrl.u32 %v880, 7
  %v882 = vsub.s32 0, %v881
  %v883 = vrot.slane %v878, %v882
  %v886 = vsel %vm71, %v868, 0
  %v889 = vsel %vm71, %v869, 0
  %v892 = vsel %vm71, %v870, 0
  %v895 = vsel %vm71, %v871, 0
  %v898 = vsel %vm71, %v872, 0
  %v901 = vsel %vm71, %v873, 0
  %v904 = vsel %vm71, %v874, 0
  %v907 = vsel %vm71, %v875, 0
  %909 = vmatprep.subr.mxu0 0.0
  %910 = vmatpush1.msra.mxu0 0.0
  %911 = vmatprep.subr.mxu0 0.0
  %912 = vmatpush1.msra.mxu0 0.0
  %913 = vmatprep.subr.mxu0 0.0
  %914 = vmatpush1.msra.mxu0 0.0
  %915 = vmatprep.subr.mxu0 0.0
  %916 = vmatpush1.msra.mxu0 0.0
  %917 = vmatprep.subr.mxu0 0.0
  %918 = vmatpush1.msra.mxu0 0.0
  %919 = vmatprep.subr.mxu0 0.0
  %920 = vmatpush1.msra.mxu0 0.0
  %921 = vmatprep.subr.mxu0 0.0
  %922 = vmatpush1.msra.mxu0 0.0
  %923 = vmatprep.subr.mxu0 0.0
  %924 = vmatpush1.msra.mxu0 0.0
  %925 = vmatprep.subr.mxu0 0.0
  %926 = vmatpush1.msra.mxu0 0.0
  %927 = vmatprep.subr.mxu0 0.0
  %928 = vmatpush1.msra.mxu0 0.0
  %929 = vmatprep.subr.mxu0 0.0
  %930 = vmatpush1.msra.mxu0 0.0
  %931 = vmatprep.subr.mxu0 0.0
  %932 = vmatpush1.msra.mxu0 0.0
  %933 = vmatprep.subr.mxu0 0.0
  %934 = vmatpush1.msra.mxu0 0.0
  %935 = vmatprep.subr.mxu0 0.0
  %936 = vmatpush1.msra.mxu0 0.0
  %937 = vmatprep.subr.mxu0 0.0
  %938 = vmatpush1.msra.mxu0 %v877
  %939 = vmatprep.subr.mxu0 0.0
  %940 = vmatpush1.msra.mxu0 %v876
  %941 = vmatprep.subr.mxu0 0.0
  %942 = vmatpush2.msra.mxu0 0.0
  %943 = vmatprep.subr.mxu0 0.0
  %944 = vmatpush2.msra.mxu0 0.0
  %945 = vmatprep.subr.mxu0 0.0
  %946 = vmatpush2.msra.mxu0 0.0
  %947 = vmatprep.subr.mxu0 0.0
  %948 = vmatpush2.msra.mxu0 0.0
  %949 = vmatprep.subr.mxu0 0.0
  %950 = vmatpush2.msra.mxu0 0.0
  %951 = vmatprep.subr.mxu0 0.0
  %952 = vmatpush2.msra.mxu0 0.0
  %953 = vmatprep.subr.mxu0 0.0
  %954 = vmatpush2.msra.mxu0 0.0
  %955 = vmatprep.subr.mxu0 0.0
  %956 = vmatpush2.msra.mxu0 0.0
  %957 = vmatprep.subr.mxu0 0.0
  %958 = vmatpush2.msra.mxu0 0.0
  %959 = vmatprep.subr.mxu0 0.0
  %960 = vmatpush2.msra.mxu0 0.0
  %961 = vmatprep.subr.mxu0 0.0
  %962 = vmatpush2.msra.mxu0 0.0
  %963 = vmatprep.subr.mxu0 0.0
  %964 = vmatpush2.msra.mxu0 0.0
  %965 = vmatprep.subr.mxu0 0.0
  %966 = vmatpush2.msra.mxu0 0.0
  %967 = vmatprep.subr.mxu0 0.0
  %968 = vmatpush2.msra.mxu0 0.0
  %969 = vmatprep.subr.mxu0 0.0
  %970 = vmatpush2.msra.mxu0 0.0
  %971 = vmatprep.subr.mxu0 0.0
  %972 = vmatpush2.msra.mxu0 0.0
  %973 = vmatprep.mubr.f32.mxu0 0.0
  %974 = vmatmul.mubr.f32.gmra.mxu0 %v886
  %v975 = vpop.f32.mrf.mxu0
  %v976 = vadd.f32 %v883, %v975
  %v977 = vpop.f32.mrf.mxu0
  %978 = vmatprep.mubr.f32.mxu0 0.0
  %979 = vmatmul.mubr.f32.gmra.mxu0 %v889
  %v980 = vpop.f32.mrf.mxu0
  %v981 = vadd.f32 %v883, %v980
  %v982 = vpop.f32.mrf.mxu0
  %983 = vmatprep.mubr.f32.mxu0 0.0
  %984 = vmatmul.mubr.f32.gmra.mxu0 %v892
  %v985 = vpop.f32.mrf.mxu0
  %v986 = vadd.f32 %v883, %v985
  %v987 = vpop.f32.mrf.mxu0
  %988 = vmatprep.mubr.f32.mxu0 0.0
  %989 = vmatmul.mubr.f32.gmra.mxu0 %v895
  %v990 = vpop.f32.mrf.mxu0
  %v991 = vadd.f32 %v883, %v990
  %v992 = vpop.f32.mrf.mxu0
  %993 = vmatprep.mubr.f32.mxu0 0.0
  %994 = vmatmul.mubr.f32.gmra.mxu0 %v898
  %v995 = vpop.f32.mrf.mxu0
  %v996 = vadd.f32 %v883, %v995
  %v997 = vpop.f32.mrf.mxu0
  %998 = vmatprep.mubr.f32.mxu0 0.0
  %999 = vmatmul.mubr.f32.gmra.mxu0 %v901
  %v1000 = vpop.f32.mrf.mxu0
  %v1001 = vadd.f32 %v883, %v1000
  %v1002 = vpop.f32.mrf.mxu0
  %1003 = vmatprep.mubr.f32.mxu0 0.0
  %1004 = vmatmul.mubr.f32.gmra.mxu0 %v904
  %v1005 = vpop.f32.mrf.mxu0
  %v1006 = vadd.f32 %v883, %v1005
  %v1007 = vpop.f32.mrf.mxu0
  %1008 = vmatprep.mubr.f32.mxu0 0.0
  %1009 = vmatmul.mubr.f32.gmra.mxu0 %v907
  %v1010 = vpop.f32.mrf.mxu0
  %v1011 = vadd.f32 %v883, %v1010
  %v1012 = vpop.f32.mrf.mxu0
  %1013 = vdwg.mxu0
  %v1014 = vmax.f32 %v976, 0.0
  %v1015 = vmax.f32 %v981, 0.0
  %v1016 = vmax.f32 %v986, 0.0
  %v1017 = vmax.f32 %v991, 0.0
  %v1018 = vmax.f32 %v996, 0.0
  %v1019 = vmax.f32 %v1001, 0.0
  %v1020 = vmax.f32 %v1006, 0.0
  %v1021 = vmax.f32 %v1011, 0.0
  %1022 = vst.msk [vmem:[%s209 + $0x1] sm:$0xff] %vm26, %v1014
  %1023 = vst.msk [vmem:[%s209 + $0x11] sm:$0xff] %vm26, %v1015
  %1024 = vst.msk [vmem:[%s209 + $0x21] sm:$0xff] %vm26, %v1016
  %1025 = vst.msk [vmem:[%s209 + $0x31] sm:$0xff] %vm26, %v1017
  %1026 = vst.msk [vmem:[%s209 + $0x41] sm:$0xff] %vm26, %v1018
  %1027 = vst.msk [vmem:[%s209 + $0x51] sm:$0xff] %vm26, %v1019
  %1028 = vst.msk [vmem:[%s209 + $0x61] sm:$0xff] %vm26, %v1020
  %1029 = vst.msk [vmem:[%s209 + $0x71] sm:$0xff] %vm26, %v1021
  %v1030 = vld [vmem:[%s3] sm:$0xff]
  %v1031 = vld [vmem:[#allocation2] sm:$0xff]
  %v1032 = vld [vmem:[#allocation2 + $0x10] sm:$0xff]
  %v1033 = vld [vmem:[#allocation2 + $0x20] sm:$0xff]
  %v1034 = vld [vmem:[#allocation2 + $0x30] sm:$0xff]
  %v1035 = vld [vmem:[#allocation2 + $0x40] sm:$0xff]
  %v1036 = vld [vmem:[#allocation2 + $0x50] sm:$0xff]
  %v1037 = vld [vmem:[#allocation2 + $0x60] sm:$0xff]
  %v1038 = vld [vmem:[#allocation2 + $0x70] sm:$0xff]
  %v1039 = vld [vmem:[#allocation2 + $0x1] sm:$0xff]
  %v1040 = vld [vmem:[#allocation2 + $0x11] sm:$0xff]
  %v1041 = vld [vmem:[#allocation2 + $0x21] sm:$0xff]
  %v1042 = vld [vmem:[#allocation2 + $0x31] sm:$0xff]
  %v1043 = vld [vmem:[#allocation2 + $0x41] sm:$0xff]
  %v1044 = vld [vmem:[#allocation2 + $0x51] sm:$0xff]
  %v1045 = vld [vmem:[#allocation2 + $0x61] sm:$0xff]
  %v1046 = vld [vmem:[#allocation2 + $0x71] sm:$0xff]
  %v1047 = vld [vmem:[#allocation2 + $0x2] sm:$0xff]
  %v1048 = vld [vmem:[#allocation2 + $0x12] sm:$0xff]
  %v1049 = vld [vmem:[#allocation2 + $0x22] sm:$0xff]
  %v1050 = vld [vmem:[#allocation2 + $0x32] sm:$0xff]
  %v1051 = vld [vmem:[#allocation2 + $0x42] sm:$0xff]
  %v1052 = vld [vmem:[#allocation2 + $0x52] sm:$0xff]
  %v1053 = vld [vmem:[#allocation2 + $0x62] sm:$0xff]
  %v1054 = vld [vmem:[#allocation2 + $0x72] sm:$0xff]
  %v1055 = vld [vmem:[%s209] sm:$0xff]
  %v1056 = vld [vmem:[%s209 + $0x10] sm:$0xff]
  %v1057 = vld [vmem:[%s209 + $0x20] sm:$0xff]
  %v1058 = vld [vmem:[%s209 + $0x30] sm:$0xff]
  %v1059 = vld [vmem:[%s209 + $0x40] sm:$0xff]
  %v1060 = vld [vmem:[%s209 + $0x50] sm:$0xff]
  %v1061 = vld [vmem:[%s209 + $0x60] sm:$0xff]
  %v1062 = vld [vmem:[%s209 + $0x70] sm:$0xff]
  %v1063 = vld [vmem:[%s209 + $0x2] sm:$0xff]
  %v1064 = vld [vmem:[%s209 + $0x12] sm:$0xff]
  %v1065 = vld [vmem:[%s209 + $0x22] sm:$0xff]
  %v1066 = vld [vmem:[%s209 + $0x32] sm:$0xff]
  %v1067 = vld [vmem:[%s209 + $0x42] sm:$0xff]
  %v1068 = vld [vmem:[%s209 + $0x52] sm:$0xff]
  %v1069 = vld [vmem:[%s209 + $0x62] sm:$0xff]
  %v1070 = vld [vmem:[%s209 + $0x72] sm:$0xff]
  %v1071 = vld [vmem:[%s259] sm:$0xff]
  %v1072 = vld [vmem:[%s259 + $0x10] sm:$0xff]
  %v1073 = vld [vmem:[%s259 + $0x20] sm:$0xff]
  %v1074 = vld [vmem:[%s259 + $0x30] sm:$0xff]
  %v1075 = vld [vmem:[%s259 + $0x40] sm:$0xff]
  %v1076 = vld [vmem:[%s259 + $0x50] sm:$0xff]
  %v1077 = vld [vmem:[%s259 + $0x60] sm:$0xff]
  %v1078 = vld [vmem:[%s259 + $0x70] sm:$0xff]
  %v1079 = vld [vmem:[%s259 + $0x1] sm:$0xff]
  %v1080 = vld [vmem:[%s259 + $0x11] sm:$0xff]
  %v1081 = vld [vmem:[%s259 + $0x21] sm:$0xff]
  %v1082 = vld [vmem:[%s259 + $0x31] sm:$0xff]
  %v1083 = vld [vmem:[%s259 + $0x41] sm:$0xff]
  %v1084 = vld [vmem:[%s259 + $0x51] sm:$0xff]
  %v1085 = vld [vmem:[%s259 + $0x61] sm:$0xff]
  %v1086 = vld [vmem:[%s259 + $0x71] sm:$0xff]
  %v1087 = vld [vmem:[%s259 + $0x2] sm:$0xff]
  %v1088 = vld [vmem:[%s259 + $0x12] sm:$0xff]
  %v1089 = vld [vmem:[%s259 + $0x22] sm:$0xff]
  %v1090 = vld [vmem:[%s259 + $0x32] sm:$0xff]
  %v1091 = vld [vmem:[%s259 + $0x42] sm:$0xff]
  %v1092 = vld [vmem:[%s259 + $0x52] sm:$0xff]
  %v1093 = vld [vmem:[%s259 + $0x62] sm:$0xff]
  %v1094 = vld [vmem:[%s259 + $0x72] sm:$0xff]
  %1103 = vrot.lane.b32.xlu0 %v1039, 8
  %v1104 = vpop.permute.xlu0 %1103
  %1105 = vrot.lane.b32.xlu0 %v1040, 8
  %v1106 = vpop.permute.xlu0 %1105
  %1107 = vrot.lane.b32.xlu0 %v1041, 8
  %v1108 = vpop.permute.xlu0 %1107
  %1109 = vrot.lane.b32.xlu0 %v1042, 8
  %v1110 = vpop.permute.xlu0 %1109
  %1111 = vrot.lane.b32.xlu0 %v1043, 8
  %v1112 = vpop.permute.xlu0 %1111
  %1113 = vrot.lane.b32.xlu0 %v1044, 8
  %v1114 = vpop.permute.xlu0 %1113
  %1115 = vrot.lane.b32.xlu0 %v1045, 8
  %v1116 = vpop.permute.xlu0 %1115
  %1117 = vrot.lane.b32.xlu0 %v1046, 8
  %v1118 = vpop.permute.xlu0 %1117
  %1135 = vrot.lane.b32.xlu0 %v1047, 16
  %v1136 = vpop.permute.xlu0 %1135
  %1137 = vrot.lane.b32.xlu0 %v1048, 16
  %v1138 = vpop.permute.xlu0 %1137
  %1139 = vrot.lane.b32.xlu0 %v1049, 16
  %v1140 = vpop.permute.xlu0 %1139
  %1141 = vrot.lane.b32.xlu0 %v1050, 16
  %v1142 = vpop.permute.xlu0 %1141
  %1143 = vrot.lane.b32.xlu0 %v1051, 16
  %v1144 = vpop.permute.xlu0 %1143
  %1145 = vrot.lane.b32.xlu0 %v1052, 16
  %v1146 = vpop.permute.xlu0 %1145
  %1147 = vrot.lane.b32.xlu0 %v1053, 16
  %v1148 = vpop.permute.xlu0 %1147
  %1149 = vrot.lane.b32.xlu0 %v1054, 16
  %v1150 = vpop.permute.xlu0 %1149
  %1167 = vrot.lane.b32.xlu0 %v1055, 24
  %v1168 = vpop.permute.xlu0 %1167
  %1169 = vrot.lane.b32.xlu0 %v1056, 24
  %v1170 = vpop.permute.xlu0 %1169
  %1171 = vrot.lane.b32.xlu0 %v1057, 24
  %v1172 = vpop.permute.xlu0 %1171
  %1173 = vrot.lane.b32.xlu0 %v1058, 24
  %v1174 = vpop.permute.xlu0 %1173
  %1175 = vrot.lane.b32.xlu0 %v1059, 24
  %v1176 = vpop.permute.xlu0 %1175
  %1177 = vrot.lane.b32.xlu0 %v1060, 24
  %v1178 = vpop.permute.xlu0 %1177
  %1179 = vrot.lane.b32.xlu0 %v1061, 24
  %v1180 = vpop.permute.xlu0 %1179
  %1181 = vrot.lane.b32.xlu0 %v1062, 24
  %v1182 = vpop.permute.xlu0 %1181
  %1199 = vrot.lane.b32.xlu0 %v1063, 32
  %v1200 = vpop.permute.xlu0 %1199
  %1201 = vrot.lane.b32.xlu0 %v1064, 32
  %v1202 = vpop.permute.xlu0 %1201
  %1203 = vrot.lane.b32.xlu0 %v1065, 32
  %v1204 = vpop.permute.xlu0 %1203
  %1205 = vrot.lane.b32.xlu0 %v1066, 32
  %v1206 = vpop.permute.xlu0 %1205
  %1207 = vrot.lane.b32.xlu0 %v1067, 32
  %v1208 = vpop.permute.xlu0 %1207
  %1209 = vrot.lane.b32.xlu0 %v1068, 32
  %v1210 = vpop.permute.xlu0 %1209
  %1211 = vrot.lane.b32.xlu0 %v1069, 32
  %v1212 = vpop.permute.xlu0 %1211
  %1213 = vrot.lane.b32.xlu0 %v1070, 32
  %v1214 = vpop.permute.xlu0 %1213
  %1231 = vrot.lane.b32.xlu0 %v1071, 40
  %v1232 = vpop.permute.xlu0 %1231
  %1233 = vrot.lane.b32.xlu0 %v1072, 40
  %v1234 = vpop.permute.xlu0 %1233
  %1235 = vrot.lane.b32.xlu0 %v1073, 40
  %v1236 = vpop.permute.xlu0 %1235
  %1237 = vrot.lane.b32.xlu0 %v1074, 40
  %v1238 = vpop.permute.xlu0 %1237
  %1239 = vrot.lane.b32.xlu0 %v1075, 40
  %v1240 = vpop.permute.xlu0 %1239
  %1241 = vrot.lane.b32.xlu0 %v1076, 40
  %v1242 = vpop.permute.xlu0 %1241
  %1243 = vrot.lane.b32.xlu0 %v1077, 40
  %v1244 = vpop.permute.xlu0 %1243
  %1245 = vrot.lane.b32.xlu0 %v1078, 40
  %v1246 = vpop.permute.xlu0 %1245
  %1263 = vrot.lane.b32.xlu0 %v1079, 48
  %v1264 = vpop.permute.xlu0 %1263
  %1265 = vrot.lane.b32.xlu0 %v1080, 48
  %v1266 = vpop.permute.xlu0 %1265
  %1267 = vrot.lane.b32.xlu0 %v1081, 48
  %v1268 = vpop.permute.xlu0 %1267
  %1269 = vrot.lane.b32.xlu0 %v1082, 48
  %v1270 = vpop.permute.xlu0 %1269
  %1271 = vrot.lane.b32.xlu0 %v1083, 48
  %v1272 = vpop.permute.xlu0 %1271
  %1273 = vrot.lane.b32.xlu0 %v1084, 48
  %v1274 = vpop.permute.xlu0 %1273
  %1275 = vrot.lane.b32.xlu0 %v1085, 48
  %v1276 = vpop.permute.xlu0 %1275
  %1277 = vrot.lane.b32.xlu0 %v1086, 48
  %v1278 = vpop.permute.xlu0 %1277
  %1295 = vrot.lane.b32.xlu0 %v1087, 56
  %v1296 = vpop.permute.xlu0 %1295
  %1297 = vrot.lane.b32.xlu0 %v1088, 56
  %v1298 = vpop.permute.xlu0 %1297
  %1299 = vrot.lane.b32.xlu0 %v1089, 56
  %v1300 = vpop.permute.xlu0 %1299
  %1301 = vrot.lane.b32.xlu0 %v1090, 56
  %v1302 = vpop.permute.xlu0 %1301
  %1303 = vrot.lane.b32.xlu0 %v1091, 56
  %v1304 = vpop.permute.xlu0 %1303
  %1305 = vrot.lane.b32.xlu0 %v1092, 56
  %v1306 = vpop.permute.xlu0 %1305
  %1307 = vrot.lane.b32.xlu0 %v1093, 56
  %v1308 = vpop.permute.xlu0 %1307
  %1309 = vrot.lane.b32.xlu0 %v1094, 56
  %v1310 = vpop.permute.xlu0 %1309
  %v1319 = vsel %vm26, %v1031, %v1104
  %v1320 = vsel %vm26, %v1032, %v1106
  %v1321 = vsel %vm26, %v1033, %v1108
  %v1322 = vsel %vm26, %v1034, %v1110
  %v1323 = vsel %vm26, %v1035, %v1112
  %v1324 = vsel %vm26, %v1036, %v1114
  %v1325 = vsel %vm26, %v1037, %v1116
  %v1326 = vsel %vm26, %v1038, %v1118
  %v1327 = vsel %vm71, %v1319, %v1136
  %v1328 = vsel %vm71, %v1320, %v1138
  %v1329 = vsel %vm71, %v1321, %v1140
  %v1330 = vsel %vm71, %v1322, %v1142
  %v1331 = vsel %vm71, %v1323, %v1144
  %v1332 = vsel %vm71, %v1324, %v1146
  %v1333 = vsel %vm71, %v1325, %v1148
  %v1334 = vsel %vm71, %v1326, %v1150
  %v1335 = vsel %vm524, %v1327, %v1168
  %v1336 = vsel %vm524, %v1328, %v1170
  %v1337 = vsel %vm524, %v1329, %v1172
  %v1338 = vsel %vm524, %v1330, %v1174
  %v1339 = vsel %vm524, %v1331, %v1176
  %v1340 = vsel %vm524, %v1332, %v1178
  %v1341 = vsel %vm524, %v1333, %v1180
  %v1342 = vsel %vm524, %v1334, %v1182
  %v1343 = vsel %vm533, %v1335, %v1200
  %v1344 = vsel %vm533, %v1336, %v1202
  %v1345 = vsel %vm533, %v1337, %v1204
  %v1346 = vsel %vm533, %v1338, %v1206
  %v1347 = vsel %vm533, %v1339, %v1208
  %v1348 = vsel %vm533, %v1340, %v1210
  %v1349 = vsel %vm533, %v1341, %v1212
  %v1350 = vsel %vm533, %v1342, %v1214
  %v1351 = vsel %vm542, %v1343, %v1232
  %v1352 = vsel %vm542, %v1344, %v1234
  %v1353 = vsel %vm542, %v1345, %v1236
  %v1354 = vsel %vm542, %v1346, %v1238
  %v1355 = vsel %vm542, %v1347, %v1240
  %v1356 = vsel %vm542, %v1348, %v1242
  %v1357 = vsel %vm542, %v1349, %v1244
  %v1358 = vsel %vm542, %v1350, %v1246
  %v1359 = vsel %vm551, %v1351, %v1264
  %v1360 = vsel %vm551, %v1352, %v1266
  %v1361 = vsel %vm551, %v1353, %v1268
  %v1362 = vsel %vm551, %v1354, %v1270
  %v1363 = vsel %vm551, %v1355, %v1272
  %v1364 = vsel %vm551, %v1356, %v1274
  %v1365 = vsel %vm551, %v1357, %v1276
  %v1366 = vsel %vm551, %v1358, %v1278
  %v1367 = vsel %vm560, %v1359, %v1296
  %v1368 = vsel %vm560, %v1360, %v1298
  %v1369 = vsel %vm560, %v1361, %v1300
  %v1370 = vsel %vm560, %v1362, %v1302
  %v1371 = vsel %vm560, %v1363, %v1304
  %v1372 = vsel %vm560, %v1364, %v1306
  %v1373 = vsel %vm560, %v1365, %v1308
  %v1374 = vsel %vm560, %v1366, %v1310
  %v1375 = vld [vmem:[%s4] sm:$0xff]
  %v1376 = vld [vmem:[%s4 + $0x8] sm:$0xff]
  %v1377 = vld [vmem:[%s4 + $0x10] sm:$0xff]
  %v1378 = vld [vmem:[%s4 + $0x18] sm:$0xff]
  %v1379 = vld [vmem:[%s4 + $0x20] sm:$0xff]
  %v1380 = vld [vmem:[%s4 + $0x28] sm:$0xff]
  %v1381 = vld [vmem:[%s4 + $0x30] sm:$0xff]
  %v1382 = vld [vmem:[%s4 + $0x38] sm:$0xff]
  %v1384 = vsel %vm577, %v1367, 0
  %v1387 = vsel %vm577, %v1368, 0
  %v1390 = vsel %vm577, %v1369, 0
  %v1393 = vsel %vm577, %v1370, 0
  %v1396 = vsel %vm577, %v1371, 0
  %v1399 = vsel %vm577, %v1372, 0
  %v1402 = vsel %vm577, %v1373, 0
  %v1405 = vsel %vm577, %v1374, 0
  %1407 = vmatprep.subr.mxu0 0.0
  %1408 = vmatpush1.msra.mxu0 0.0
  %1409 = vmatprep.subr.mxu0 0.0
  %1410 = vmatpush1.msra.mxu0 0.0
  %1411 = vmatprep.subr.mxu0 0.0
  %1412 = vmatpush1.msra.mxu0 0.0
  %1413 = vmatprep.subr.mxu0 0.0
  %1414 = vmatpush1.msra.mxu0 0.0
  %1415 = vmatprep.subr.mxu0 0.0
  %1416 = vmatpush1.msra.mxu0 0.0
  %1417 = vmatprep.subr.mxu0 0.0
  %1418 = vmatpush1.msra.mxu0 0.0
  %1419 = vmatprep.subr.mxu0 0.0
  %1420 = vmatpush1.msra.mxu0 0.0
  %1421 = vmatprep.subr.mxu0 0.0
  %1422 = vmatpush1.msra.mxu0 0.0
  %1423 = vmatprep.subr.mxu0 0.0
  %1424 = vmatpush1.msra.mxu0 %v1382
  %1425 = vmatprep.subr.mxu0 0.0
  %1426 = vmatpush1.msra.mxu0 %v1381
  %1427 = vmatprep.subr.mxu0 0.0
  %1428 = vmatpush1.msra.mxu0 %v1380
  %1429 = vmatprep.subr.mxu0 0.0
  %1430 = vmatpush1.msra.mxu0 %v1379
  %1431 = vmatprep.subr.mxu0 0.0
  %1432 = vmatpush1.msra.mxu0 %v1378
  %1433 = vmatprep.subr.mxu0 0.0
  %1434 = vmatpush1.msra.mxu0 %v1377
  %1435 = vmatprep.subr.mxu0 0.0
  %1436 = vmatpush1.msra.mxu0 %v1376
  %1437 = vmatprep.subr.mxu0 0.0
  %1438 = vmatpush1.msra.mxu0 %v1375
  %1439 = vmatprep.subr.mxu0 0.0
  %1440 = vmatpush2.msra.mxu0 0.0
  %1441 = vmatprep.subr.mxu0 0.0
  %1442 = vmatpush2.msra.mxu0 0.0
  %1443 = vmatprep.subr.mxu0 0.0
  %1444 = vmatpush2.msra.mxu0 0.0
  %1445 = vmatprep.subr.mxu0 0.0
  %1446 = vmatpush2.msra.mxu0 0.0
  %1447 = vmatprep.subr.mxu0 0.0
  %1448 = vmatpush2.msra.mxu0 0.0
  %1449 = vmatprep.subr.mxu0 0.0
  %1450 = vmatpush2.msra.mxu0 0.0
  %1451 = vmatprep.subr.mxu0 0.0
  %1452 = vmatpush2.msra.mxu0 0.0
  %1453 = vmatprep.subr.mxu0 0.0
  %1454 = vmatpush2.msra.mxu0 0.0
  %1455 = vmatprep.subr.mxu0 0.0
  %1456 = vmatpush2.msra.mxu0 0.0
  %1457 = vmatprep.subr.mxu0 0.0
  %1458 = vmatpush2.msra.mxu0 0.0
  %1459 = vmatprep.subr.mxu0 0.0
  %1460 = vmatpush2.msra.mxu0 0.0
  %1461 = vmatprep.subr.mxu0 0.0
  %1462 = vmatpush2.msra.mxu0 0.0
  %1463 = vmatprep.subr.mxu0 0.0
  %1464 = vmatpush2.msra.mxu0 0.0
  %1465 = vmatprep.subr.mxu0 0.0
  %1466 = vmatpush2.msra.mxu0 0.0
  %1467 = vmatprep.subr.mxu0 0.0
  %1468 = vmatpush2.msra.mxu0 0.0
  %1469 = vmatprep.subr.mxu0 0.0
  %1470 = vmatpush2.msra.mxu0 0.0
  %1471 = vmatprep.mubr.f32.mxu0 0.0
  %1472 = vmatmul.mubr.f32.gmra.mxu0 %v1384
  %v1473 = vpop.f32.mrf.mxu0
  %v1474 = vadd.f32 0.0, %v1473
  %v1475 = vpop.f32.mrf.mxu0
  %1476 = vmatprep.mubr.f32.mxu0 0.0
  %1477 = vmatmul.mubr.f32.gmra.mxu0 %v1387
  %v1478 = vpop.f32.mrf.mxu0
  %v1479 = vadd.f32 0.0, %v1478
  %v1480 = vpop.f32.mrf.mxu0
  %1481 = vmatprep.mubr.f32.mxu0 0.0
  %1482 = vmatmul.mubr.f32.gmra.mxu0 %v1390
  %v1483 = vpop.f32.mrf.mxu0
  %v1484 = vadd.f32 0.0, %v1483
  %v1485 = vpop.f32.mrf.mxu0
  %1486 = vmatprep.mubr.f32.mxu0 0.0
  %1487 = vmatmul.mubr.f32.gmra.mxu0 %v1393
  %v1488 = vpop.f32.mrf.mxu0
  %v1489 = vadd.f32 0.0, %v1488
  %v1490 = vpop.f32.mrf.mxu0
  %1491 = vmatprep.mubr.f32.mxu0 0.0
  %1492 = vmatmul.mubr.f32.gmra.mxu0 %v1396
  %v1493 = vpop.f32.mrf.mxu0
  %v1494 = vadd.f32 0.0, %v1493
  %v1495 = vpop.f32.mrf.mxu0
  %1496 = vmatprep.mubr.f32.mxu0 0.0
  %1497 = vmatmul.mubr.f32.gmra.mxu0 %v1399
  %v1498 = vpop.f32.mrf.mxu0
  %v1499 = vadd.f32 0.0, %v1498
  %v1500 = vpop.f32.mrf.mxu0
  %1501 = vmatprep.mubr.f32.mxu0 0.0
  %1502 = vmatmul.mubr.f32.gmra.mxu0 %v1402
  %v1503 = vpop.f32.mrf.mxu0
  %v1504 = vadd.f32 0.0, %v1503
  %v1505 = vpop.f32.mrf.mxu0
  %1506 = vmatprep.mubr.f32.mxu0 0.0
  %1507 = vmatmul.mubr.f32.gmra.mxu0 %v1405
  %v1508 = vpop.f32.mrf.mxu0
  %v1509 = vadd.f32 0.0, %v1508
  %v1510 = vpop.f32.mrf.mxu0
  %1511 = vdwg.mxu0
  %v1513 = vsel %vm26, %v1014, 0
  %v1516 = vsel %vm26, %v1015, 0
  %v1519 = vsel %vm26, %v1016, 0
  %v1522 = vsel %vm26, %v1017, 0
  %v1525 = vsel %vm26, %v1018, 0
  %v1528 = vsel %vm26, %v1019, 0
  %v1531 = vsel %vm26, %v1020, 0
  %v1534 = vsel %vm26, %v1021, 0
  %1536 = vmatprep.subr.mxu0 0.0
  %1537 = vmatpush1.msra.mxu0 0.0
  %1538 = vmatprep.subr.mxu0 0.0
  %1539 = vmatpush1.msra.mxu0 0.0
  %1540 = vmatprep.subr.mxu0 0.0
  %1541 = vmatpush1.msra.mxu0 0.0
  %1542 = vmatprep.subr.mxu0 0.0
  %1543 = vmatpush1.msra.mxu0 0.0
  %1544 = vmatprep.subr.mxu0 0.0
  %1545 = vmatpush1.msra.mxu0 0.0
  %1546 = vmatprep.subr.mxu0 0.0
  %1547 = vmatpush1.msra.mxu0 0.0
  %1548 = vmatprep.subr.mxu0 0.0
  %1549 = vmatpush1.msra.mxu0 0.0
  %1550 = vmatprep.subr.mxu0 0.0
  %1551 = vmatpush1.msra.mxu0 0.0
  %1552 = vmatprep.subr.mxu0 0.0
  %1553 = vmatpush1.msra.mxu0 0.0
  %1554 = vmatprep.subr.mxu0 0.0
  %1555 = vmatpush1.msra.mxu0 0.0
  %1556 = vmatprep.subr.mxu0 0.0
  %1557 = vmatpush1.msra.mxu0 0.0
  %1558 = vmatprep.subr.mxu0 0.0
  %1559 = vmatpush1.msra.mxu0 0.0
  %1560 = vmatprep.subr.mxu0 0.0
  %1561 = vmatpush1.msra.mxu0 0.0
  %1562 = vmatprep.subr.mxu0 0.0
  %1563 = vmatpush1.msra.mxu0 0.0
  %1564 = vmatprep.subr.mxu0 0.0
  %1565 = vmatpush1.msra.mxu0 0.0
  %1566 = vmatprep.subr.mxu0 0.0
  %1567 = vmatpush1.msra.mxu0 %v1030
  %1568 = vmatprep.subr.mxu0 0.0
  %1569 = vmatpush2.msra.mxu0 0.0
  %1570 = vmatprep.subr.mxu0 0.0
  %1571 = vmatpush2.msra.mxu0 0.0
  %1572 = vmatprep.subr.mxu0 0.0
  %1573 = vmatpush2.msra.mxu0 0.0
  %1574 = vmatprep.subr.mxu0 0.0
  %1575 = vmatpush2.msra.mxu0 0.0
  %1576 = vmatprep.subr.mxu0 0.0
  %1577 = vmatpush2.msra.mxu0 0.0
  %1578 = vmatprep.subr.mxu0 0.0
  %1579 = vmatpush2.msra.mxu0 0.0
  %1580 = vmatprep.subr.mxu0 0.0
  %1581 = vmatpush2.msra.mxu0 0.0
  %1582 = vmatprep.subr.mxu0 0.0
  %1583 = vmatpush2.msra.mxu0 0.0
  %1584 = vmatprep.subr.mxu0 0.0
  %1585 = vmatpush2.msra.mxu0 0.0
  %1586 = vmatprep.subr.mxu0 0.0
  %1587 = vmatpush2.msra.mxu0 0.0
  %1588 = vmatprep.subr.mxu0 0.0
  %1589 = vmatpush2.msra.mxu0 0.0
  %1590 = vmatprep.subr.mxu0 0.0
  %1591 = vmatpush2.msra.mxu0 0.0
  %1592 = vmatprep.subr.mxu0 0.0
  %1593 = vmatpush2.msra.mxu0 0.0
  %1594 = vmatprep.subr.mxu0 0.0
  %1595 = vmatpush2.msra.mxu0 0.0
  %1596 = vmatprep.subr.mxu0 0.0
  %1597 = vmatpush2.msra.mxu0 0.0
  %1598 = vmatprep.subr.mxu0 0.0
  %1599 = vmatpush2.msra.mxu0 0.0
  %1600 = vmatprep.mubr.f32.mxu0 0.0
  %1601 = vmatmul.mubr.f32.gmra.mxu0 %v1513
  %v1602 = vpop.f32.mrf.mxu0
  %v1603 = vadd.f32 %v1474, %v1602
  %v1604 = vpop.f32.mrf.mxu0
  %1605 = vmatprep.mubr.f32.mxu0 0.0
  %1606 = vmatmul.mubr.f32.gmra.mxu0 %v1516
  %v1607 = vpop.f32.mrf.mxu0
  %v1608 = vadd.f32 %v1479, %v1607
  %v1609 = vpop.f32.mrf.mxu0
  %1610 = vmatprep.mubr.f32.mxu0 0.0
  %1611 = vmatmul.mubr.f32.gmra.mxu0 %v1519
  %v1612 = vpop.f32.mrf.mxu0
  %v1613 = vadd.f32 %v1484, %v1612
  %v1614 = vpop.f32.mrf.mxu0
  %1615 = vmatprep.mubr.f32.mxu0 0.0
  %1616 = vmatmul.mubr.f32.gmra.mxu0 %v1522
  %v1617 = vpop.f32.mrf.mxu0
  %v1618 = vadd.f32 %v1489, %v1617
  %v1619 = vpop.f32.mrf.mxu0
  %1620 = vmatprep.mubr.f32.mxu0 0.0
  %1621 = vmatmul.mubr.f32.gmra.mxu0 %v1525
  %v1622 = vpop.f32.mrf.mxu0
  %v1623 = vadd.f32 %v1494, %v1622
  %v1624 = vpop.f32.mrf.mxu0
  %1625 = vmatprep.mubr.f32.mxu0 0.0
  %1626 = vmatmul.mubr.f32.gmra.mxu0 %v1528
  %v1627 = vpop.f32.mrf.mxu0
  %v1628 = vadd.f32 %v1499, %v1627
  %v1629 = vpop.f32.mrf.mxu0
  %1630 = vmatprep.mubr.f32.mxu0 0.0
  %1631 = vmatmul.mubr.f32.gmra.mxu0 %v1531
  %v1632 = vpop.f32.mrf.mxu0
  %v1633 = vadd.f32 %v1504, %v1632
  %v1634 = vpop.f32.mrf.mxu0
  %1635 = vmatprep.mubr.f32.mxu0 0.0
  %1636 = vmatmul.mubr.f32.gmra.mxu0 %v1534
  %v1637 = vpop.f32.mrf.mxu0
  %v1638 = vadd.f32 %v1509, %v1637
  %v1639 = vpop.f32.mrf.mxu0
  %1640 = vdwg.mxu0
  %v1641 = vld [vmem:[%s5] sm:$0x1]
  %v1643 = vlaneseq
  %v1644 = vshrl.u32 %v1643, 7
  %v1645 = vsub.s32 0, %v1644
  %v1646 = vrot.slane %v1641, %v1645
  %v1648 = vadd.f32 %v1603, %v1646
  %v1649 = vadd.f32 %v1608, %v1646
  %v1650 = vadd.f32 %v1613, %v1646
  %v1651 = vadd.f32 %v1618, %v1646
  %v1652 = vadd.f32 %v1623, %v1646
  %v1653 = vadd.f32 %v1628, %v1646
  %v1654 = vadd.f32 %v1633, %v1646
  %v1655 = vadd.f32 %v1638, %v1646
  %v1656 = vmax.f32 %v1648, 0.0
  %v1657 = vmax.f32 %v1649, 0.0
  %v1658 = vmax.f32 %v1650, 0.0
  %v1659 = vmax.f32 %v1651, 0.0
  %v1660 = vmax.f32 %v1652, 0.0
  %v1661 = vmax.f32 %v1653, 0.0
  %v1662 = vmax.f32 %v1654, 0.0
  %v1663 = vmax.f32 %v1655, 0.0
  %s1664 = scalar_lea.vmem %s7, 64
  %1665 = vst.msk [vmem:[%s1664] sm:$0xff] %vm533, %v1656
  %1666 = vst.msk [vmem:[%s1664 + $0x8] sm:$0xff] %vm533, %v1657
  %1667 = vst.msk [vmem:[%s1664 + $0x10] sm:$0xff] %vm533, %v1658
  %1668 = vst.msk [vmem:[%s1664 + $0x18] sm:$0xff] %vm533, %v1659
  %1669 = vst.msk [vmem:[%s1664 + $0x20] sm:$0xff] %vm533, %v1660
  %1670 = vst.msk [vmem:[%s1664 + $0x28] sm:$0xff] %vm533, %v1661
  %1671 = vst.msk [vmem:[%s1664 + $0x30] sm:$0xff] %vm533, %v1662
  %1672 = vst.msk [vmem:[%s1664 + $0x38] sm:$0xff] %vm533, %v1663
  // Predicated region
  $region30: #{tpu_custom_call.1} parent=0 // pred_check
    _
  $region31: #{tpu_custom_call.1} parent=0 // pred_check_branch
    %1674 = sbr.rel (0) target = $region33
  $region32: #{tpu_custom_call.1} parent=0 // pred_region
    _
  $region33: #{tpu_custom_call.1} parent=0 // pred_fallthru
    _
  // Predicated region
  $region34: #{tpu_custom_call.1} parent=0 // pred_check
    _
  $region35: #{tpu_custom_call.1} parent=0 // pred_check_branch
    %1676 = sbr.rel (0) target = $region37
  $region36: #{tpu_custom_call.1} parent=0 // pred_region
    _
  $region37: #{tpu_custom_call.1} parent=0 // pred_fallthru
    _

</llo_original>
